<compile_context>
chip_gen: v6e
topology: v6e:2x2x1
jax: 0.10.0
libtpu: 0.0.40
codegen_flags: <defaults>
</compile_context>

<pallas_src>
import functools

import jax
import jax.numpy as jnp
from jax.experimental import pallas as pl
from jax.experimental.pallas import tpu as pltpu


def _conv1x1_bn_kernel(x_ref, w_ref, sb_ref, o_ref):
    """One M-block: full-K matmul + fused per-channel affine epilogue."""
    y = jnp.dot(x_ref[...], w_ref[...], preferred_element_type=jnp.float32)
    # sb_ref row 0 = scale, row 1 = bias (broadcast over the tm rows).
    o_ref[...] = (y * sb_ref[0:1, :] + sb_ref[1:2, :]).astype(o_ref.dtype)


@functools.partial(jax.jit, static_argnames=("tm",))
def conv1x1_bn(x_tokens, w_t, scale_bias, *, tm=256):
    """x_tokens: (M, K), w_t: (K, N), scale_bias: (2, N) f32 -> (M, N) f32.

    Single grid axis over M; K and N are untiled (weight fully VMEM-resident,
    constant block index -> no re-streaming). Output N=256 stays lane-dense.
    """
    M, K = x_tokens.shape
    K_w, N = w_t.shape
    assert K_w == K and M % tm == 0

    return pl.pallas_call(
        _conv1x1_bn_kernel,
        out_shape=jax.ShapeDtypeStruct((M, N), jnp.float32),
        grid_spec=pltpu.PrefetchScalarGridSpec(
            num_scalar_prefetch=0,
            grid=(M // tm,),
            in_specs=[
                pl.BlockSpec((tm, K), lambda i: (i, 0)),   # activations
                pl.BlockSpec((K, N), lambda i: (0, 0)),    # resident weight
                pl.BlockSpec((2, N), lambda i: (0, 0)),    # fused [scale; bias]
            ],
            out_specs=pl.BlockSpec((tm, N), lambda i: (i, 0)),
        ),
        compiler_params=pltpu.CompilerParams(
            dimension_semantics=("parallel",),
        ),
    )(x_tokens, w_t, scale_bias)


class RadarObjectDetectorPallas:
    """JAX/Pallas re-implementation of RadarObjectDetector.forward (no fusion branch)."""

    P1 = 16
    P2 = 16
    IN_CH = 1280
    OUT_CH = 256
    BN_EPS = 1e-5

    def __init__(self, key):
        k_w, k_b = jax.random.split(key, 2)
        # Conv2d(1280, 256, kernel_size=1) parameters (kaiming-uniform-ish bound).
        fan_in = self.IN_CH
        bound = 1.0 / (fan_in ** 0.5)
        # Weight stored as (C_out, C_in); 1x1 spatial dims are squeezed.
        self.conv_w = jax.random.uniform(
            k_w, (self.OUT_CH, self.IN_CH), jnp.float32, -bound, bound
        )
        self.conv_b = jax.random.uniform(
            k_b, (self.OUT_CH,), jnp.float32, -bound, bound
        )
        # BatchNorm2d(256) parameters, fresh-initialized (eval-mode semantics).
        self.bn_gamma = jnp.ones((self.OUT_CH,), jnp.float32)
        self.bn_beta = jnp.zeros((self.OUT_CH,), jnp.float32)
        self.bn_mean = jnp.zeros((self.OUT_CH,), jnp.float32)
        self.bn_var = jnp.ones((self.OUT_CH,), jnp.float32)

    def __call__(self, x, compute_dtype=jnp.float32):
        """x: encoder-output token tensor of shape (B, 256, 1280), float32.

        compute_dtype: dtype fed to the MXU (jnp.float32 for exact module
        semantics, jnp.bfloat16 to halve HBM traffic; accumulation and the
        affine epilogue stay f32 either way).

        Returns the NCHW tensor (B, 256, 16, 16) that PyTorch would pass to
        the (undefined) decoder.
        """
        B, P, D = x.shape
        assert P == self.P1 * self.P2 and D == self.IN_CH

        # --- glue: fold conv bias + BN into a per-channel (scale, bias) pair ---
        inv_std = 1.0 / jnp.sqrt(self.bn_var + self.BN_EPS)
        scale = self.bn_gamma * inv_std
        fused_bias = (self.conv_b - self.bn_mean) * scale + self.bn_beta
        scale_bias = jnp.stack([scale, fused_bias], axis=0)        # (2, N) f32

        # --- glue: flatten tokens, transpose weight for (K, N) matmul layout ---
        x_tokens = x.reshape(B * P, D).astype(compute_dtype)       # (M, K)
        w_t = self.conv_w.T.astype(compute_dtype)                  # (K, N)

        # --- hot path: Pallas matmul + fused affine (single grid axis over M) ---
        y = conv1x1_bn(x_tokens, w_t, scale_bias, tm=256)          # (B*P, 256) f32

        # --- glue: back to NCHW (b, 256, 16, 16), token t = p1*16 + p2 ---
        # (If the downstream decoder can take channels-last, this transpose
        #  could be skipped; kept here to match the PyTorch layout.)
        y = y.reshape(B, self.P1, self.P2, self.OUT_CH)
        y = jnp.transpose(y, (0, 3, 1, 2))
        return y


if __name__ == "__main__":
    key = jax.random.PRNGKey(0)
    k_param, k_x = jax.random.split(key)

    model = RadarObjectDetectorPallas(k_param)

    # Encoder output tokens: batch=2, 256 patches (16x16), 1280-dim features.
    B = 2
    x = jax.random.normal(k_x, (B, 256, 1280), jnp.float32)

    # --- f32 path (exact module semantics) ---
    out = model(x)
    out = jax.block_until_ready(out)
    assert out.shape == (B, 256, 16, 16), out.shape
    assert out.dtype == jnp.float32

    # Plain-JAX reference of the same math.
    ref = jnp.einsum("btd,cd->btc", x, model.conv_w) + model.conv_b
    ref = (ref - model.bn_mean) / jnp.sqrt(model.bn_var + 1e-5)
    ref = ref * model.bn_gamma + model.bn_beta
    ref = jnp.transpose(ref.reshape(B, 16, 16, 256), (0, 3, 1, 2))
    assert jnp.allclose(out, ref, atol=2e-4, rtol=2e-4)

    # --- bf16-fed path (memory-bound optimization; looser tolerance) ---
    out_bf16 = jax.block_until_ready(model(x, compute_dtype=jnp.bfloat16))
    assert out_bf16.shape == (B, 256, 16, 16)
    assert out_bf16.dtype == jnp.float32
    assert jnp.allclose(out_bf16, ref, atol=3e-2, rtol=3e-2)

    print("KERNEL_OK")
</pallas_src>

<mosaic_0001>
module attributes {stable_mosaic.version = 11 : i64} {
  func.func @_conv1x1_bn_kernel(%arg0: i32, %arg1: memref<256x1280xf32, #tpu.memory_space<vmem>>, %arg2: memref<1280x256xf32, #tpu.memory_space<vmem>>, %arg3: memref<2x256xf32, #tpu.memory_space<vmem>>, %arg4: memref<256x256xf32, #tpu.memory_space<vmem>>) attributes {dimension_semantics = [#tpu.dimension_semantics<parallel>], iteration_bounds = array<i64: 2>, scalar_prefetch = 0 : i64, scratch_operands = 0 : i64, tpu.core_type = #tpu.core_type<tc>, window_params = [{transform_indices = @transform_0, window_bounds = array<i64: 256, 1280>}, {pipeline_mode = #tpu.pipeline_mode<synchronous>, transform_indices = @transform_1, window_bounds = array<i64: 1280, 256>}, {pipeline_mode = #tpu.pipeline_mode<synchronous>, transform_indices = @transform_2, window_bounds = array<i64: 2, 256>}, {transform_indices = @transform_3, window_bounds = array<i64: 256, 256>}]} {
    %c0 = arith.constant 0 : index
    %c0_0 = arith.constant 0 : index
    %0 = vector.load %arg1[%c0, %c0_0] : memref<256x1280xf32, #tpu.memory_space<vmem>>, vector<256x1280xf32>
    %c0_1 = arith.constant 0 : index
    %c0_2 = arith.constant 0 : index
    %1 = vector.load %arg2[%c0_1, %c0_2] : memref<1280x256xf32, #tpu.memory_space<vmem>>, vector<1280x256xf32>
    %cst = arith.constant dense<0.000000e+00> : vector<256x256xf32>
    %2 = tpu.matmul %0, %1, %cst {dimension_numbers = #tpu.dot_dimension_numbers<[1], [0], [0], [1], [0, 0, 1, 1], [], []>} : vector<256x1280xf32>, vector<1280x256xf32>, vector<256x256xf32> -> vector<256x256xf32>
    %c0_3 = arith.constant 0 : index
    %c0_4 = arith.constant 0 : index
    %3 = vector.load %arg3[%c0_3, %c0_4] : memref<2x256xf32, #tpu.memory_space<vmem>>, vector<1x256xf32>
    %4 = vector.broadcast %3 : vector<1x256xf32> to vector<256x256xf32>
    %5 = arith.mulf %2, %4 : vector<256x256xf32>
    %c1 = arith.constant 1 : index
    %c0_5 = arith.constant 0 : index
    %6 = vector.load %arg3[%c1, %c0_5] : memref<2x256xf32, #tpu.memory_space<vmem>>, vector<1x256xf32>
    %7 = vector.broadcast %6 : vector<1x256xf32> to vector<256x256xf32>
    %8 = arith.addf %5, %7 : vector<256x256xf32>
    %c0_6 = arith.constant 0 : index
    %c0_7 = arith.constant 0 : index
    %9 = vector.load %arg4[%c0_6, %c0_7] : memref<256x256xf32, #tpu.memory_space<vmem>>, vector<256x256xf32>
    tpu.vector_store %arg4[%c0_6, %c0_7], %8 {strides = array<i32>} : memref<256x256xf32, #tpu.memory_space<vmem>>, vector<256x256xf32>,
    return
  }
  func.func @transform_0(%arg0: i32) -> (i32, i32) {
    %c0_i32 = arith.constant 0 : i32
    %c0_i32_0 = arith.constant 0 : i32
    return %arg0, %c0_i32 : i32, i32
  }
  func.func @transform_1(%arg0: i32) -> (i32, i32) {
    %c0_i32 = arith.constant 0 : i32
    %c0_i32_0 = arith.constant 0 : i32
    %c0_i32_1 = arith.constant 0 : i32
    return %c0_i32, %c0_i32_0 : i32, i32
  }
  func.func @transform_2(%arg0: i32) -> (i32, i32) {
    %c0_i32 = arith.constant 0 : i32
    %c0_i32_0 = arith.constant 0 : i32
    %c0_i32_1 = arith.constant 0 : i32
    return %c0_i32, %c0_i32_0 : i32, i32
  }
  func.func @transform_3(%arg0: i32) -> (i32, i32) {
    %c0_i32 = arith.constant 0 : i32
    %c0_i32_0 = arith.constant 0 : i32
    return %arg0, %c0_i32 : i32, i32
  }
}

</mosaic_0001>

<llo_original>
// kernel: conv1x1_bn.1
$region0: #{conv1x1_bn.1}
  #allocation0 [shape = 'u32[]', space=smem, size = 0x4, offset = 0x4, fixed_abs, tag = 'smem constant byte address 0x4 - core index']
  #allocation1 [shape = 'u32[144,128]{1,0:T(1,128)}', space=vmem, size = 0x12000, scoped, tag = 'internal scratch']
  %s0 = inlined_call_operand.hbm [shape: f32[512,1280], index: 0, kind: input, shape index: {}]
  %s1 = inlined_call_operand.hbm [shape: f32[1280,256], index: 1, kind: input, shape index: {}]
  %s2 = inlined_call_operand.hbm [shape: f32[2,256], index: 2, kind: input, shape index: {}]
  %s3 = inlined_call_operand.hbm [shape: f32[512,256], index: 3, kind: output, shape index: {}]
  %s4 = sld [smem:[#allocation0]]
  $region57: #{conv1x1_bn.1} parent=0
    _
  %s6 = ssub.s32 1, %s4
  %s7 = scalar_select 0, %s6, %s4
  $region1: #{conv1x1_bn.1} parent=0
    #allocation2 [shape = 'u8[2621440]{0}', space=vmem, size = 0x280000, scoped, tag = 'input window, operand 0']
    #allocation3 [shape = 's32[2]{0}', space=sflag, size = 0x8, scoped, tag = 'scoped memory for conv1x1_bn.1']
    #allocation4 [shape = 's32[2]{0}', space=sflag, size = 0x8, scoped, tag = 'scoped memory for conv1x1_bn.1']
    #allocation5 [shape = 'u8[1310720]{0}', space=vmem, size = 0x140000, scoped, tag = 'input window, operand 1, single buffered']
    #allocation6 [shape = 's32[1]{0}', space=sflag, size = 0x4, scoped, tag = 'scoped memory for conv1x1_bn.1']
    #allocation7 [shape = 'u8[2048]{0}', space=vmem, size = 0x800, scoped, tag = 'input window, operand 2, single buffered']
    #allocation8 [shape = 'u8[524288]{0}', space=vmem, size = 0x80000, scoped, tag = 'output window, operand 0']
    %8 = vsyncpa [#allocation3], 0
    %s9 = scalar_lea.sflag [#allocation3], 1
    %10 = vsyncpa %s9, 0
    %11 = vsyncpa [#allocation6], 0
    %12 = vsyncpa [#allocation4], 0
    %s13 = scalar_lea.sflag [#allocation4], 1
    %14 = vsyncpa %s13, 0
    loop: start=0, step=1, limit=4
    $region2: #{conv1x1_bn.1} parent=1 // loop_pre_header
      _
    $region3: #{conv1x1_bn.1} parent=1 // loop_header
      %s16 = sphi 0, %s20
      %p17 = scmp.ge.s32.totalorder %s16, 4
      %s26 = sphi 0, %s28
      %s29 = sphi 0, %s26
      %s30 = sphi 0, %s29
      %s46 = sphi 0, %s30
      %s50 = sphi 0, %s50
      %s52 = sphi 0, %s50
      %s53 = sphi 0, %s52
      %s67 = sphi 0, %s53
      %s71 = sphi 0, %s71
      %s73 = sphi 0, %s71
      %s74 = sphi 0, %s73
      %s88 = sphi 0, %s74
      %s94 = sphi 0, %s96
      %s97 = sphi 0, %s94
      %s98 = sphi 0, %s97
      %s114 = sphi 0, %s98
    $region4: #{conv1x1_bn.1} parent=1 // loop_header_branch
      %19 = sbr.rel (%p17) target = $region8
    $region5: #{conv1x1_bn.1} parent=1 // loop_body
      %s21 = ssub.s32 %s16, 1
      %s22 = ssub.s32 %s16, 2
      %s23 = sadd.s32 %s16, 1
      %s24 = ssub.s32 %s16, %s23
      %p25 = scmp.eq.s32.totalorder %s24, 0
      %s27 = sadd.s32 %s26, 1
      %s28 = scalar_select %p25, %s26, %s27
      %p31 = pneg %p25
      %p32 = scmp.eq.s32.totalorder %s16, 1
      %p33 = por %p31, %p32
      %p34 = scmp.ne.s32.totalorder %s26, %s29
      %p35 = scmp.eq.s32.totalorder %s16, 0
      %p36 = por %p34, %p35
      %p37 = scmp.ne.s32.totalorder %s26, %s29
      %p38 = scmp.eq.s32.totalorder %s21, 1
      %p39 = por %p37, %p38
      %p40 = scmp.ne.s32.totalorder %s29, %s30
      %p41 = scmp.eq.s32.totalorder %s21, 0
      %p42 = por %p40, %p41
      %p43 = scmp.ne.s32.totalorder %s29, %s30
      %p44 = scmp.eq.s32.totalorder %s22, 1
      %p45 = por %p43, %p44
      %p47 = scmp.ne.s32.totalorder %s30, %s46
      %p48 = scmp.eq.s32.totalorder %s22, 0
      %p49 = por %p47, %p48
      %s51 = sadd.s32 %s50, 1
      %p54 = scmp.eq.s32.totalorder %s16, 1
      %p55 = scmp.ne.s32.totalorder %s50, %s52
      %p56 = scmp.eq.s32.totalorder %s16, 0
      %p57 = por %p55, %p56
      %p58 = scmp.ne.s32.totalorder %s50, %s52
      %p59 = scmp.eq.s32.totalorder %s21, 1
      %p60 = por %p58, %p59
      %p61 = scmp.ne.s32.totalorder %s52, %s53
      %p62 = scmp.eq.s32.totalorder %s21, 0
      %p63 = por %p61, %p62
      %p64 = scmp.ne.s32.totalorder %s52, %s53
      %p65 = scmp.eq.s32.totalorder %s22, 1
      %p66 = por %p64, %p65
      %p68 = scmp.ne.s32.totalorder %s53, %s67
      %p69 = scmp.eq.s32.totalorder %s22, 0
      %p70 = por %p68, %p69
      %s72 = sadd.s32 %s71, 1
      %p75 = scmp.eq.s32.totalorder %s16, 1
      %p76 = scmp.ne.s32.totalorder %s71, %s73
      %p77 = scmp.eq.s32.totalorder %s16, 0
      %p78 = por %p76, %p77
      %p79 = scmp.ne.s32.totalorder %s71, %s73
      %p80 = scmp.eq.s32.totalorder %s21, 1
      %p81 = por %p79, %p80
      %p82 = scmp.ne.s32.totalorder %s73, %s74
      %p83 = scmp.eq.s32.totalorder %s21, 0
      %p84 = por %p82, %p83
      %p85 = scmp.ne.s32.totalorder %s73, %s74
      %p86 = scmp.eq.s32.totalorder %s22, 1
      %p87 = por %p85, %p86
      %p89 = scmp.ne.s32.totalorder %s74, %s88
      %p90 = scmp.eq.s32.totalorder %s22, 0
      %p91 = por %p89, %p90
      %s92 = ssub.s32 %s16, %s23
      %p93 = scmp.eq.s32.totalorder %s92, 0
      %s95 = sadd.s32 %s94, 1
      %s96 = scalar_select %p93, %s94, %s95
      %p99 = pneg %p93
      %p100 = scmp.eq.s32.totalorder %s16, 1
      %p101 = por %p99, %p100
      %p102 = scmp.ne.s32.totalorder %s94, %s97
      %p103 = scmp.eq.s32.totalorder %s16, 0
      %p104 = por %p102, %p103
      %p105 = scmp.ne.s32.totalorder %s94, %s97
      %p106 = scmp.eq.s32.totalorder %s21, 1
      %p107 = por %p105, %p106
      %p108 = scmp.ne.s32.totalorder %s97, %s98
      %p109 = scmp.eq.s32.totalorder %s21, 0
      %p110 = por %p108, %p109
      %p111 = scmp.ne.s32.totalorder %s97, %s98
      %p112 = scmp.eq.s32.totalorder %s22, 1
      %p113 = por %p111, %p112
      %p115 = scmp.ne.s32.totalorder %s98, %s114
      %p116 = scmp.eq.s32.totalorder %s22, 0
      %p117 = por %p115, %p116
      %p118 = scmp.le.s32.totalorder 1, %s16
      %p119 = scmp.lt.s32.totalorder %s16, 3
      %p120 = pnand %p118, %p119
      %p121 = pneg %p120
      // Predicated region
      $region9: #{conv1x1_bn.1} parent=5 // pred_check
        _
      $region10: #{conv1x1_bn.1} parent=5 // pred_check_branch
        %123 = sbr.rel (%p120) target = $region12
      $region11: #{conv1x1_bn.1} parent=5 // pred_region
        %s124 = ssub.s32 %s16, 1
        // Predicated region
        $region13: #{conv1x1_bn.1} parent=11 // pred_check
          %p125 = pneg %p63
        $region14: #{conv1x1_bn.1} parent=11 // pred_check_branch
          %127 = sbr.rel (%p125) target = $region16
        $region15: #{conv1x1_bn.1} parent=11 // pred_region
          %s129 = ssub.s32 40960, 40960
          %130 = vsyncadd [#allocation6], %s129
          %s131 = sshll.u32 [#allocation5], 4
          %s132 = int_to_ptr.vmem [resolvable:$true] %s131
          %137 = dma.hbm_to_vmem [thread:$0]  %s1, 40960, %s132, [#allocation6], 256, 256, 16
        $region16: #{conv1x1_bn.1} parent=11 // pred_fallthru
          _
        // Predicated region
        $region17: #{conv1x1_bn.1} parent=11 // pred_check
          %p138 = pneg %p84
        $region18: #{conv1x1_bn.1} parent=11 // pred_check_branch
          %140 = sbr.rel (%p138) target = $region20
        $region19: #{conv1x1_bn.1} parent=11 // pred_region
          %s142 = ssub.s32 64, 64
          %143 = vsyncadd [#allocation6], %s142
          %s145 = sshll.u32 [#allocation7], 4
          %s146 = int_to_ptr.vmem [resolvable:$true] %s145
          %148 = dma.hbm_to_vmem [thread:$0]  %s2, 64, %s146, [#allocation6]
        $region20: #{conv1x1_bn.1} parent=11 // pred_fallthru
          _
      $region12: #{conv1x1_bn.1} parent=5 // pred_fallthru
        _
      %p149 = scmp.lt.s32.totalorder %s16, 2
      // Predicated region
      $region21: #{conv1x1_bn.1} parent=5 // pred_check
        %p150 = pneg %p149
      $region22: #{conv1x1_bn.1} parent=5 // pred_check_branch
        %152 = sbr.rel (%p150) target = $region24
      $region23: #{conv1x1_bn.1} parent=5 // pred_region
        // Predicated region
        $region25: #{conv1x1_bn.1} parent=23 // pred_check
          %p153 = pneg %p36
        $region26: #{conv1x1_bn.1} parent=23 // pred_check_branch
          %155 = sbr.rel (%p153) target = $region28
        $region27: #{conv1x1_bn.1} parent=23 // pred_region
          %s156 = sand.u32 %s26, 1
          %s157 = scalar_lea.sflag [#allocation3], %s156
          %s158 = sand.u32 %s26, 1
          %s159 = smul.addr %s158, 2560
          %s160 = scalar_lea.vmem [#allocation2], %s159
          %s161 = smul.u32 32, %s16
          %s163 = ssub.s32 40960, 40960
          %164 = vsyncadd %s157, %s163
          %s165 = smul.addr %s161, 10
          %s166 = smul.addr %s165, 128
          %s167 = scalar_lea.hbm %s0, %s166
          %s168 = sshll.u32 %s160, 4
          %s169 = int_to_ptr.vmem [resolvable:$true] %s168
          %174 = dma.hbm_to_vmem [thread:$0]  %s167, 40960, %s169, %s157, 1280, 1280, 80
        $region28: #{conv1x1_bn.1} parent=23 // pred_fallthru
          _
      $region24: #{conv1x1_bn.1} parent=5 // pred_fallthru
        _
      %p175 = scmp.le.s32.totalorder 1, %s16
      %p176 = scmp.lt.s32.totalorder %s16, 3
      %p177 = pnand %p175, %p176
      %p178 = pneg %p177
      // Predicated region
      $region29: #{conv1x1_bn.1} parent=5 // pred_check
        _
      $region30: #{conv1x1_bn.1} parent=5 // pred_check_branch
        %180 = sbr.rel (%p177) target = $region32
      $region31: #{conv1x1_bn.1} parent=5 // pred_region
        %s181 = ssub.s32 %s16, 1
        %s182 = sand.u32 %s29, 1
        %s183 = scalar_lea.sflag [#allocation3], %s182
        %s184 = sand.u32 %s29, 1
        %s185 = smul.addr %s184, 2560
        %s186 = scalar_lea.vmem [#allocation2], %s185
        // Predicated region
        $region33: #{conv1x1_bn.1} parent=31 // pred_check
          %p187 = pneg %p42
        $region34: #{conv1x1_bn.1} parent=31 // pred_check_branch
          %189 = sbr.rel (%p187) target = $region36
        $region35: #{conv1x1_bn.1} parent=31 // pred_region
          %190 = dma.done %s183, 40960
        $region36: #{conv1x1_bn.1} parent=31 // pred_fallthru
          _
        // Predicated region
        $region37: #{conv1x1_bn.1} parent=31 // pred_check
          %p191 = pneg %p63
        $region38: #{conv1x1_bn.1} parent=31 // pred_check_branch
          %193 = sbr.rel (%p191) target = $region40
        $region39: #{conv1x1_bn.1} parent=31 // pred_region
          %194 = dma.done [#allocation6], 40960
        $region40: #{conv1x1_bn.1} parent=31 // pred_fallthru
          _
        // Predicated region
        $region41: #{conv1x1_bn.1} parent=31 // pred_check
          %p195 = pneg %p84
        $region42: #{conv1x1_bn.1} parent=31 // pred_check_branch
          %197 = sbr.rel (%p195) target = $region44
        $region43: #{conv1x1_bn.1} parent=31 // pred_region
          %198 = dma.done [#allocation6], 64
        $region44: #{conv1x1_bn.1} parent=31 // pred_fallthru
          _
        %s199 = sand.u32 %s29, 1
        %s200 = scalar_lea.sflag [#allocation3], %s199
        %s201 = sand.u32 %s29, 1
        %s202 = smul.addr %s201, 2560
        %s203 = scalar_lea.vmem [#allocation2], %s202
        %p204 = pneg %p42
        %p205 = pneg %p39
        %p206 = pneg %p63
        %p207 = pneg %p60
        %p208 = pneg %p84
        %p209 = pneg %p81
        %p210 = pneg %p110
        %p211 = pneg %p107
        %s212 = sand.u32 %s97, 1
        %s213 = scalar_lea.sflag [#allocation4], %s212
        %s214 = sand.u32 %s97, 1
        %s215 = smul.addr %s214, 512
        %s216 = scalar_lea.vmem [#allocation8], %s215
        %s217 = smul.u32 32, %s21
        %s218 = smul.u32 32, %s21
        %v219 = vld [vmem:[%s186] sm:$0xff]
        %v220 = vld [vmem:[%s186 + $0x8] sm:$0xff]
        %v221 = vld [vmem:[%s186 + $0x10] sm:$0xff]
        %v222 = vld [vmem:[%s186 + $0x18] sm:$0xff]
        %v223 = vld [vmem:[%s186 + $0x20] sm:$0xff]
        %v224 = vld [vmem:[%s186 + $0x28] sm:$0xff]
        %v225 = vld [vmem:[%s186 + $0x30] sm:$0xff]
        %v226 = vld [vmem:[%s186 + $0x38] sm:$0xff]
        %v227 = vld [vmem:[%s186 + $0x40] sm:$0xff]
        %v228 = vld [vmem:[%s186 + $0x48] sm:$0xff]
        %v229 = vld [vmem:[%s186 + $0x50] sm:$0xff]
        %v230 = vld [vmem:[%s186 + $0x58] sm:$0xff]
        %v231 = vld [vmem:[%s186 + $0x60] sm:$0xff]
        %v232 = vld [vmem:[%s186 + $0x68] sm:$0xff]
        %v233 = vld [vmem:[%s186 + $0x70] sm:$0xff]
        %v234 = vld [vmem:[%s186 + $0x78] sm:$0xff]
        %v235 = vld [vmem:[%s186 + $0x80] sm:$0xff]
        %v236 = vld [vmem:[%s186 + $0x88] sm:$0xff]
        %v237 = vld [vmem:[%s186 + $0x90] sm:$0xff]
        %v238 = vld [vmem:[%s186 + $0x98] sm:$0xff]
        %v239 = vld [vmem:[%s186 + $0xa0] sm:$0xff]
        %v240 = vld [vmem:[%s186 + $0xa8] sm:$0xff]
        %v241 = vld [vmem:[%s186 + $0xb0] sm:$0xff]
        %v242 = vld [vmem:[%s186 + $0xb8] sm:$0xff]
        %v243 = vld [vmem:[%s186 + $0xc0] sm:$0xff]
        %v244 = vld [vmem:[%s186 + $0xc8] sm:$0xff]
        %v245 = vld [vmem:[%s186 + $0xd0] sm:$0xff]
        %v246 = vld [vmem:[%s186 + $0xd8] sm:$0xff]
        %v247 = vld [vmem:[%s186 + $0xe0] sm:$0xff]
        %v248 = vld [vmem:[%s186 + $0xe8] sm:$0xff]
        %v249 = vld [vmem:[%s186 + $0xf0] sm:$0xff]
        %v250 = vld [vmem:[%s186 + $0xf8] sm:$0xff]
        %v251 = vld [vmem:[%s186 + $0x100] sm:$0xff]
        %v252 = vld [vmem:[%s186 + $0x108] sm:$0xff]
        %v253 = vld [vmem:[%s186 + $0x110] sm:$0xff]
        %v254 = vld [vmem:[%s186 + $0x118] sm:$0xff]
        %v255 = vld [vmem:[%s186 + $0x120] sm:$0xff]
        %v256 = vld [vmem:[%s186 + $0x128] sm:$0xff]
        %v257 = vld [vmem:[%s186 + $0x130] sm:$0xff]
        %v258 = vld [vmem:[%s186 + $0x138] sm:$0xff]
        %v259 = vld [vmem:[%s186 + $0x140] sm:$0xff]
        %v260 = vld [vmem:[%s186 + $0x148] sm:$0xff]
        %v261 = vld [vmem:[%s186 + $0x150] sm:$0xff]
        %v262 = vld [vmem:[%s186 + $0x158] sm:$0xff]
        %v263 = vld [vmem:[%s186 + $0x160] sm:$0xff]
        %v264 = vld [vmem:[%s186 + $0x168] sm:$0xff]
        %v265 = vld [vmem:[%s186 + $0x170] sm:$0xff]
        %v266 = vld [vmem:[%s186 + $0x178] sm:$0xff]
        %v267 = vld [vmem:[%s186 + $0x180] sm:$0xff]
        %v268 = vld [vmem:[%s186 + $0x188] sm:$0xff]
        %v269 = vld [vmem:[%s186 + $0x190] sm:$0xff]
        %v270 = vld [vmem:[%s186 + $0x198] sm:$0xff]
        %v271 = vld [vmem:[%s186 + $0x1a0] sm:$0xff]
        %v272 = vld [vmem:[%s186 + $0x1a8] sm:$0xff]
        %v273 = vld [vmem:[%s186 + $0x1b0] sm:$0xff]
        %v274 = vld [vmem:[%s186 + $0x1b8] sm:$0xff]
        %v275 = vld [vmem:[%s186 + $0x1c0] sm:$0xff]
        %v276 = vld [vmem:[%s186 + $0x1c8] sm:$0xff]
        %v277 = vld [vmem:[%s186 + $0x1d0] sm:$0xff]
        %v278 = vld [vmem:[%s186 + $0x1d8] sm:$0xff]
        %v279 = vld [vmem:[%s186 + $0x1e0] sm:$0xff]
        %v280 = vld [vmem:[%s186 + $0x1e8] sm:$0xff]
        %v281 = vld [vmem:[%s186 + $0x1f0] sm:$0xff]
        %v282 = vld [vmem:[%s186 + $0x1f8] sm:$0xff]
        %v283 = vld [vmem:[%s186 + $0x200] sm:$0xff]
        %v284 = vld [vmem:[%s186 + $0x208] sm:$0xff]
        %v285 = vld [vmem:[%s186 + $0x210] sm:$0xff]
        %v286 = vld [vmem:[%s186 + $0x218] sm:$0xff]
        %v287 = vld [vmem:[%s186 + $0x220] sm:$0xff]
        %v288 = vld [vmem:[%s186 + $0x228] sm:$0xff]
        %v289 = vld [vmem:[%s186 + $0x230] sm:$0xff]
        %v290 = vld [vmem:[%s186 + $0x238] sm:$0xff]
        %v291 = vld [vmem:[%s186 + $0x240] sm:$0xff]
        %v292 = vld [vmem:[%s186 + $0x248] sm:$0xff]
        %v293 = vld [vmem:[%s186 + $0x250] sm:$0xff]
        %v294 = vld [vmem:[%s186 + $0x258] sm:$0xff]
        %v295 = vld [vmem:[%s186 + $0x260] sm:$0xff]
        %v296 = vld [vmem:[%s186 + $0x268] sm:$0xff]
        %v297 = vld [vmem:[%s186 + $0x270] sm:$0xff]
        %v298 = vld [vmem:[%s186 + $0x278] sm:$0xff]
        %v299 = vld [vmem:[%s186 + $0x280] sm:$0xff]
        %v300 = vld [vmem:[%s186 + $0x288] sm:$0xff]
        %v301 = vld [vmem:[%s186 + $0x290] sm:$0xff]
        %v302 = vld [vmem:[%s186 + $0x298] sm:$0xff]
        %v303 = vld [vmem:[%s186 + $0x2a0] sm:$0xff]
        %v304 = vld [vmem:[%s186 + $0x2a8] sm:$0xff]
        %v305 = vld [vmem:[%s186 + $0x2b0] sm:$0xff]
        %v306 = vld [vmem:[%s186 + $0x2b8] sm:$0xff]
        %v307 = vld [vmem:[%s186 + $0x2c0] sm:$0xff]
        %v308 = vld [vmem:[%s186 + $0x2c8] sm:$0xff]
        %v309 = vld [vmem:[%s186 + $0x2d0] sm:$0xff]
        %v310 = vld [vmem:[%s186 + $0x2d8] sm:$0xff]
        %v311 = vld [vmem:[%s186 + $0x2e0] sm:$0xff]
        %v312 = vld [vmem:[%s186 + $0x2e8] sm:$0xff]
        %v313 = vld [vmem:[%s186 + $0x2f0] sm:$0xff]
        %v314 = vld [vmem:[%s186 + $0x2f8] sm:$0xff]
        %v315 = vld [vmem:[%s186 + $0x300] sm:$0xff]
        %v316 = vld [vmem:[%s186 + $0x308] sm:$0xff]
        %v317 = vld [vmem:[%s186 + $0x310] sm:$0xff]
        %v318 = vld [vmem:[%s186 + $0x318] sm:$0xff]
        %v319 = vld [vmem:[%s186 + $0x320] sm:$0xff]
        %v320 = vld [vmem:[%s186 + $0x328] sm:$0xff]
        %v321 = vld [vmem:[%s186 + $0x330] sm:$0xff]
        %v322 = vld [vmem:[%s186 + $0x338] sm:$0xff]
        %v323 = vld [vmem:[%s186 + $0x340] sm:$0xff]
        %v324 = vld [vmem:[%s186 + $0x348] sm:$0xff]
        %v325 = vld [vmem:[%s186 + $0x350] sm:$0xff]
        %v326 = vld [vmem:[%s186 + $0x358] sm:$0xff]
        %v327 = vld [vmem:[%s186 + $0x360] sm:$0xff]
        %v328 = vld [vmem:[%s186 + $0x368] sm:$0xff]
        %v329 = vld [vmem:[%s186 + $0x370] sm:$0xff]
        %v330 = vld [vmem:[%s186 + $0x378] sm:$0xff]
        %v331 = vld [vmem:[%s186 + $0x380] sm:$0xff]
        %v332 = vld [vmem:[%s186 + $0x388] sm:$0xff]
        %v333 = vld [vmem:[%s186 + $0x390] sm:$0xff]
        %v334 = vld [vmem:[%s186 + $0x398] sm:$0xff]
        %v335 = vld [vmem:[%s186 + $0x3a0] sm:$0xff]
        %v336 = vld [vmem:[%s186 + $0x3a8] sm:$0xff]
        %v337 = vld [vmem:[%s186 + $0x3b0] sm:$0xff]
        %v338 = vld [vmem:[%s186 + $0x3b8] sm:$0xff]
        %v339 = vld [vmem:[%s186 + $0x3c0] sm:$0xff]
        %v340 = vld [vmem:[%s186 + $0x3c8] sm:$0xff]
        %v341 = vld [vmem:[%s186 + $0x3d0] sm:$0xff]
        %v342 = vld [vmem:[%s186 + $0x3d8] sm:$0xff]
        %v343 = vld [vmem:[%s186 + $0x3e0] sm:$0xff]
        %v344 = vld [vmem:[%s186 + $0x3e8] sm:$0xff]
        %v345 = vld [vmem:[%s186 + $0x3f0] sm:$0xff]
        %v346 = vld [vmem:[%s186 + $0x3f8] sm:$0xff]
        %v347 = vld [vmem:[%s186 + $0x400] sm:$0xff]
        %v348 = vld [vmem:[%s186 + $0x408] sm:$0xff]
        %v349 = vld [vmem:[%s186 + $0x410] sm:$0xff]
        %v350 = vld [vmem:[%s186 + $0x418] sm:$0xff]
        %v351 = vld [vmem:[%s186 + $0x420] sm:$0xff]
        %v352 = vld [vmem:[%s186 + $0x428] sm:$0xff]
        %v353 = vld [vmem:[%s186 + $0x430] sm:$0xff]
        %v354 = vld [vmem:[%s186 + $0x438] sm:$0xff]
        %v355 = vld [vmem:[%s186 + $0x440] sm:$0xff]
        %v356 = vld [vmem:[%s186 + $0x448] sm:$0xff]
        %v357 = vld [vmem:[%s186 + $0x450] sm:$0xff]
        %v358 = vld [vmem:[%s186 + $0x458] sm:$0xff]
        %v359 = vld [vmem:[%s186 + $0x460] sm:$0xff]
        %v360 = vld [vmem:[%s186 + $0x468] sm:$0xff]
        %v361 = vld [vmem:[%s186 + $0x470] sm:$0xff]
        %v362 = vld [vmem:[%s186 + $0x478] sm:$0xff]
        %v363 = vld [vmem:[%s186 + $0x480] sm:$0xff]
        %v364 = vld [vmem:[%s186 + $0x488] sm:$0xff]
        %v365 = vld [vmem:[%s186 + $0x490] sm:$0xff]
        %v366 = vld [vmem:[%s186 + $0x498] sm:$0xff]
        %v367 = vld [vmem:[%s186 + $0x4a0] sm:$0xff]
        %v368 = vld [vmem:[%s186 + $0x4a8] sm:$0xff]
        %v369 = vld [vmem:[%s186 + $0x4b0] sm:$0xff]
        %v370 = vld [vmem:[%s186 + $0x4b8] sm:$0xff]
        %v371 = vld [vmem:[%s186 + $0x4c0] sm:$0xff]
        %v372 = vld [vmem:[%s186 + $0x4c8] sm:$0xff]
        %v373 = vld [vmem:[%s186 + $0x4d0] sm:$0xff]
        %v374 = vld [vmem:[%s186 + $0x4d8] sm:$0xff]
        %v375 = vld [vmem:[%s186 + $0x4e0] sm:$0xff]
        %v376 = vld [vmem:[%s186 + $0x4e8] sm:$0xff]
        %v377 = vld [vmem:[%s186 + $0x4f0] sm:$0xff]
        %v378 = vld [vmem:[%s186 + $0x4f8] sm:$0xff]
        %v379 = vld [vmem:[%s186 + $0x500] sm:$0xff]
        %v380 = vld [vmem:[%s186 + $0x508] sm:$0xff]
        %v381 = vld [vmem:[%s186 + $0x510] sm:$0xff]
        %v382 = vld [vmem:[%s186 + $0x518] sm:$0xff]
        %v383 = vld [vmem:[%s186 + $0x520] sm:$0xff]
        %v384 = vld [vmem:[%s186 + $0x528] sm:$0xff]
        %v385 = vld [vmem:[%s186 + $0x530] sm:$0xff]
        %v386 = vld [vmem:[%s186 + $0x538] sm:$0xff]
        %v387 = vld [vmem:[%s186 + $0x540] sm:$0xff]
        %v388 = vld [vmem:[%s186 + $0x548] sm:$0xff]
        %v389 = vld [vmem:[%s186 + $0x550] sm:$0xff]
        %v390 = vld [vmem:[%s186 + $0x558] sm:$0xff]
        %v391 = vld [vmem:[%s186 + $0x560] sm:$0xff]
        %v392 = vld [vmem:[%s186 + $0x568] sm:$0xff]
        %v393 = vld [vmem:[%s186 + $0x570] sm:$0xff]
        %v394 = vld [vmem:[%s186 + $0x578] sm:$0xff]
        %v395 = vld [vmem:[%s186 + $0x580] sm:$0xff]
        %v396 = vld [vmem:[%s186 + $0x588] sm:$0xff]
        %v397 = vld [vmem:[%s186 + $0x590] sm:$0xff]
        %v398 = vld [vmem:[%s186 + $0x598] sm:$0xff]
        %v399 = vld [vmem:[%s186 + $0x5a0] sm:$0xff]
        %v400 = vld [vmem:[%s186 + $0x5a8] sm:$0xff]
        %v401 = vld [vmem:[%s186 + $0x5b0] sm:$0xff]
        %v402 = vld [vmem:[%s186 + $0x5b8] sm:$0xff]
        %v403 = vld [vmem:[%s186 + $0x5c0] sm:$0xff]
        %v404 = vld [vmem:[%s186 + $0x5c8] sm:$0xff]
        %v405 = vld [vmem:[%s186 + $0x5d0] sm:$0xff]
        %v406 = vld [vmem:[%s186 + $0x5d8] sm:$0xff]
        %v407 = vld [vmem:[%s186 + $0x5e0] sm:$0xff]
        %v408 = vld [vmem:[%s186 + $0x5e8] sm:$0xff]
        %v409 = vld [vmem:[%s186 + $0x5f0] sm:$0xff]
        %v410 = vld [vmem:[%s186 + $0x5f8] sm:$0xff]
        %v411 = vld [vmem:[%s186 + $0x600] sm:$0xff]
        %v412 = vld [vmem:[%s186 + $0x608] sm:$0xff]
        %v413 = vld [vmem:[%s186 + $0x610] sm:$0xff]
        %v414 = vld [vmem:[%s186 + $0x618] sm:$0xff]
        %v415 = vld [vmem:[%s186 + $0x620] sm:$0xff]
        %v416 = vld [vmem:[%s186 + $0x628] sm:$0xff]
        %v417 = vld [vmem:[%s186 + $0x630] sm:$0xff]
        %v418 = vld [vmem:[%s186 + $0x638] sm:$0xff]
        %v419 = vld [vmem:[%s186 + $0x640] sm:$0xff]
        %v420 = vld [vmem:[%s186 + $0x648] sm:$0xff]
        %v421 = vld [vmem:[%s186 + $0x650] sm:$0xff]
        %v422 = vld [vmem:[%s186 + $0x658] sm:$0xff]
        %v423 = vld [vmem:[%s186 + $0x660] sm:$0xff]
        %v424 = vld [vmem:[%s186 + $0x668] sm:$0xff]
        %v425 = vld [vmem:[%s186 + $0x670] sm:$0xff]
        %v426 = vld [vmem:[%s186 + $0x678] sm:$0xff]
        %v427 = vld [vmem:[%s186 + $0x680] sm:$0xff]
        %v428 = vld [vmem:[%s186 + $0x688] sm:$0xff]
        %v429 = vld [vmem:[%s186 + $0x690] sm:$0xff]
        %v430 = vld [vmem:[%s186 + $0x698] sm:$0xff]
        %v431 = vld [vmem:[%s186 + $0x6a0] sm:$0xff]
        %v432 = vld [vmem:[%s186 + $0x6a8] sm:$0xff]
        %v433 = vld [vmem:[%s186 + $0x6b0] sm:$0xff]
        %v434 = vld [vmem:[%s186 + $0x6b8] sm:$0xff]
        %v435 = vld [vmem:[%s186 + $0x6c0] sm:$0xff]
        %v436 = vld [vmem:[%s186 + $0x6c8] sm:$0xff]
        %v437 = vld [vmem:[%s186 + $0x6d0] sm:$0xff]
        %v438 = vld [vmem:[%s186 + $0x6d8] sm:$0xff]
        %v439 = vld [vmem:[%s186 + $0x6e0] sm:$0xff]
        %v440 = vld [vmem:[%s186 + $0x6e8] sm:$0xff]
        %v441 = vld [vmem:[%s186 + $0x6f0] sm:$0xff]
        %v442 = vld [vmem:[%s186 + $0x6f8] sm:$0xff]
        %v443 = vld [vmem:[%s186 + $0x700] sm:$0xff]
        %v444 = vld [vmem:[%s186 + $0x708] sm:$0xff]
        %v445 = vld [vmem:[%s186 + $0x710] sm:$0xff]
        %v446 = vld [vmem:[%s186 + $0x718] sm:$0xff]
        %v447 = vld [vmem:[%s186 + $0x720] sm:$0xff]
        %v448 = vld [vmem:[%s186 + $0x728] sm:$0xff]
        %v449 = vld [vmem:[%s186 + $0x730] sm:$0xff]
        %v450 = vld [vmem:[%s186 + $0x738] sm:$0xff]
        %v451 = vld [vmem:[%s186 + $0x740] sm:$0xff]
        %v452 = vld [vmem:[%s186 + $0x748] sm:$0xff]
        %v453 = vld [vmem:[%s186 + $0x750] sm:$0xff]
        %v454 = vld [vmem:[%s186 + $0x758] sm:$0xff]
        %v455 = vld [vmem:[%s186 + $0x760] sm:$0xff]
        %v456 = vld [vmem:[%s186 + $0x768] sm:$0xff]
        %v457 = vld [vmem:[%s186 + $0x770] sm:$0xff]
        %v458 = vld [vmem:[%s186 + $0x778] sm:$0xff]
        %v459 = vld [vmem:[%s186 + $0x780] sm:$0xff]
        %v460 = vld [vmem:[%s186 + $0x788] sm:$0xff]
        %v461 = vld [vmem:[%s186 + $0x790] sm:$0xff]
        %v462 = vld [vmem:[%s186 + $0x798] sm:$0xff]
        %v463 = vld [vmem:[%s186 + $0x7a0] sm:$0xff]
        %v464 = vld [vmem:[%s186 + $0x7a8] sm:$0xff]
        %v465 = vld [vmem:[%s186 + $0x7b0] sm:$0xff]
        %v466 = vld [vmem:[%s186 + $0x7b8] sm:$0xff]
        %v467 = vld [vmem:[%s186 + $0x7c0] sm:$0xff]
        %v468 = vld [vmem:[%s186 + $0x7c8] sm:$0xff]
        %v469 = vld [vmem:[%s186 + $0x7d0] sm:$0xff]
        %v470 = vld [vmem:[%s186 + $0x7d8] sm:$0xff]
        %v471 = vld [vmem:[%s186 + $0x7e0] sm:$0xff]
        %v472 = vld [vmem:[%s186 + $0x7e8] sm:$0xff]
        %v473 = vld [vmem:[%s186 + $0x7f0] sm:$0xff]
        %v474 = vld [vmem:[%s186 + $0x7f8] sm:$0xff]
        %v475 = vld [vmem:[%s186 + $0x800] sm:$0xff]
        %v476 = vld [vmem:[%s186 + $0x808] sm:$0xff]
        %v477 = vld [vmem:[%s186 + $0x810] sm:$0xff]
        %v478 = vld [vmem:[%s186 + $0x818] sm:$0xff]
        %v479 = vld [vmem:[%s186 + $0x820] sm:$0xff]
        %v480 = vld [vmem:[%s186 + $0x828] sm:$0xff]
        %v481 = vld [vmem:[%s186 + $0x830] sm:$0xff]
        %v482 = vld [vmem:[%s186 + $0x838] sm:$0xff]
        %v483 = vld [vmem:[%s186 + $0x840] sm:$0xff]
        %v484 = vld [vmem:[%s186 + $0x848] sm:$0xff]
        %v485 = vld [vmem:[%s186 + $0x850] sm:$0xff]
        %v486 = vld [vmem:[%s186 + $0x858] sm:$0xff]
        %v487 = vld [vmem:[%s186 + $0x860] sm:$0xff]
        %v488 = vld [vmem:[%s186 + $0x868] sm:$0xff]
        %v489 = vld [vmem:[%s186 + $0x870] sm:$0xff]
        %v490 = vld [vmem:[%s186 + $0x878] sm:$0xff]
        %v491 = vld [vmem:[%s186 + $0x880] sm:$0xff]
        %v492 = vld [vmem:[%s186 + $0x888] sm:$0xff]
        %v493 = vld [vmem:[%s186 + $0x890] sm:$0xff]
        %v494 = vld [vmem:[%s186 + $0x898] sm:$0xff]
        %v495 = vld [vmem:[%s186 + $0x8a0] sm:$0xff]
        %v496 = vld [vmem:[%s186 + $0x8a8] sm:$0xff]
        %v497 = vld [vmem:[%s186 + $0x8b0] sm:$0xff]
        %v498 = vld [vmem:[%s186 + $0x8b8] sm:$0xff]
        %v499 = vld [vmem:[%s186 + $0x8c0] sm:$0xff]
        %v500 = vld [vmem:[%s186 + $0x8c8] sm:$0xff]
        %v501 = vld [vmem:[%s186 + $0x8d0] sm:$0xff]
        %v502 = vld [vmem:[%s186 + $0x8d8] sm:$0xff]
        %v503 = vld [vmem:[%s186 + $0x8e0] sm:$0xff]
        %v504 = vld [vmem:[%s186 + $0x8e8] sm:$0xff]
        %v505 = vld [vmem:[%s186 + $0x8f0] sm:$0xff]
        %v506 = vld [vmem:[%s186 + $0x8f8] sm:$0xff]
        %v507 = vld [vmem:[%s186 + $0x900] sm:$0xff]
        %v508 = vld [vmem:[%s186 + $0x908] sm:$0xff]
        %v509 = vld [vmem:[%s186 + $0x910] sm:$0xff]
        %v510 = vld [vmem:[%s186 + $0x918] sm:$0xff]
        %v511 = vld [vmem:[%s186 + $0x920] sm:$0xff]
        %v512 = vld [vmem:[%s186 + $0x928] sm:$0xff]
        %v513 = vld [vmem:[%s186 + $0x930] sm:$0xff]
        %v514 = vld [vmem:[%s186 + $0x938] sm:$0xff]
        %v515 = vld [vmem:[%s186 + $0x940] sm:$0xff]
        %v516 = vld [vmem:[%s186 + $0x948] sm:$0xff]
        %v517 = vld [vmem:[%s186 + $0x950] sm:$0xff]
        %v518 = vld [vmem:[%s186 + $0x958] sm:$0xff]
        %v519 = vld [vmem:[%s186 + $0x960] sm:$0xff]
        %v520 = vld [vmem:[%s186 + $0x968] sm:$0xff]
        %v521 = vld [vmem:[%s186 + $0x970] sm:$0xff]
        %v522 = vld [vmem:[%s186 + $0x978] sm:$0xff]
        %v523 = vld [vmem:[%s186 + $0x980] sm:$0xff]
        %v524 = vld [vmem:[%s186 + $0x988] sm:$0xff]
        %v525 = vld [vmem:[%s186 + $0x990] sm:$0xff]
        %v526 = vld [vmem:[%s186 + $0x998] sm:$0xff]
        %v527 = vld [vmem:[%s186 + $0x9a0] sm:$0xff]
        %v528 = vld [vmem:[%s186 + $0x9a8] sm:$0xff]
        %v529 = vld [vmem:[%s186 + $0x9b0] sm:$0xff]
        %v530 = vld [vmem:[%s186 + $0x9b8] sm:$0xff]
        %v531 = vld [vmem:[%s186 + $0x9c0] sm:$0xff]
        %v532 = vld [vmem:[%s186 + $0x9c8] sm:$0xff]
        %v533 = vld [vmem:[%s186 + $0x9d0] sm:$0xff]
        %v534 = vld [vmem:[%s186 + $0x9d8] sm:$0xff]
        %v535 = vld [vmem:[%s186 + $0x9e0] sm:$0xff]
        %v536 = vld [vmem:[%s186 + $0x9e8] sm:$0xff]
        %v537 = vld [vmem:[%s186 + $0x9f0] sm:$0xff]
        %v538 = vld [vmem:[%s186 + $0x9f8] sm:$0xff]
        %v539 = vld [vmem:[#allocation5] sm:$0xff]
        %v540 = vld [vmem:[#allocation5 + $0x8] sm:$0xff]
        %v541 = vld [vmem:[#allocation5 + $0x10] sm:$0xff]
        %v542 = vld [vmem:[#allocation5 + $0x18] sm:$0xff]
        %v543 = vld [vmem:[#allocation5 + $0x20] sm:$0xff]
        %v544 = vld [vmem:[#allocation5 + $0x28] sm:$0xff]
        %v545 = vld [vmem:[#allocation5 + $0x30] sm:$0xff]
        %v546 = vld [vmem:[#allocation5 + $0x38] sm:$0xff]
        %v547 = vld [vmem:[#allocation5 + $0x40] sm:$0xff]
        %v548 = vld [vmem:[#allocation5 + $0x48] sm:$0xff]
        %v549 = vld [vmem:[#allocation5 + $0x50] sm:$0xff]
        %v550 = vld [vmem:[#allocation5 + $0x58] sm:$0xff]
        %v551 = vld [vmem:[#allocation5 + $0x60] sm:$0xff]
        %v552 = vld [vmem:[#allocation5 + $0x68] sm:$0xff]
        %v553 = vld [vmem:[#allocation5 + $0x70] sm:$0xff]
        %v554 = vld [vmem:[#allocation5 + $0x78] sm:$0xff]
        %v555 = vld [vmem:[#allocation5 + $0x80] sm:$0xff]
        %v556 = vld [vmem:[#allocation5 + $0x88] sm:$0xff]
        %v557 = vld [vmem:[#allocation5 + $0x90] sm:$0xff]
        %v558 = vld [vmem:[#allocation5 + $0x98] sm:$0xff]
        %v559 = vld [vmem:[#allocation5 + $0xa0] sm:$0xff]
        %v560 = vld [vmem:[#allocation5 + $0xa8] sm:$0xff]
        %v561 = vld [vmem:[#allocation5 + $0xb0] sm:$0xff]
        %v562 = vld [vmem:[#allocation5 + $0xb8] sm:$0xff]
        %v563 = vld [vmem:[#allocation5 + $0xc0] sm:$0xff]
        %v564 = vld [vmem:[#allocation5 + $0xc8] sm:$0xff]
        %v565 = vld [vmem:[#allocation5 + $0xd0] sm:$0xff]
        %v566 = vld [vmem:[#allocation5 + $0xd8] sm:$0xff]
        %v567 = vld [vmem:[#allocation5 + $0xe0] sm:$0xff]
        %v568 = vld [vmem:[#allocation5 + $0xe8] sm:$0xff]
        %v569 = vld [vmem:[#allocation5 + $0xf0] sm:$0xff]
        %v570 = vld [vmem:[#allocation5 + $0xf8] sm:$0xff]
        %v571 = vld [vmem:[#allocation5 + $0x100] sm:$0xff]
        %v572 = vld [vmem:[#allocation5 + $0x108] sm:$0xff]
        %v573 = vld [vmem:[#allocation5 + $0x110] sm:$0xff]
        %v574 = vld [vmem:[#allocation5 + $0x118] sm:$0xff]
        %v575 = vld [vmem:[#allocation5 + $0x120] sm:$0xff]
        %v576 = vld [vmem:[#allocation5 + $0x128] sm:$0xff]
        %v577 = vld [vmem:[#allocation5 + $0x130] sm:$0xff]
        %v578 = vld [vmem:[#allocation5 + $0x138] sm:$0xff]
        %v579 = vld [vmem:[#allocation5 + $0x140] sm:$0xff]
        %v580 = vld [vmem:[#allocation5 + $0x148] sm:$0xff]
        %v581 = vld [vmem:[#allocation5 + $0x150] sm:$0xff]
        %v582 = vld [vmem:[#allocation5 + $0x158] sm:$0xff]
        %v583 = vld [vmem:[#allocation5 + $0x160] sm:$0xff]
        %v584 = vld [vmem:[#allocation5 + $0x168] sm:$0xff]
        %v585 = vld [vmem:[#allocation5 + $0x170] sm:$0xff]
        %v586 = vld [vmem:[#allocation5 + $0x178] sm:$0xff]
        %v587 = vld [vmem:[#allocation5 + $0x180] sm:$0xff]
        %v588 = vld [vmem:[#allocation5 + $0x188] sm:$0xff]
        %v589 = vld [vmem:[#allocation5 + $0x190] sm:$0xff]
        %v590 = vld [vmem:[#allocation5 + $0x198] sm:$0xff]
        %v591 = vld [vmem:[#allocation5 + $0x1a0] sm:$0xff]
        %v592 = vld [vmem:[#allocation5 + $0x1a8] sm:$0xff]
        %v593 = vld [vmem:[#allocation5 + $0x1b0] sm:$0xff]
        %v594 = vld [vmem:[#allocation5 + $0x1b8] sm:$0xff]
        %v595 = vld [vmem:[#allocation5 + $0x1c0] sm:$0xff]
        %v596 = vld [vmem:[#allocation5 + $0x1c8] sm:$0xff]
        %v597 = vld [vmem:[#allocation5 + $0x1d0] sm:$0xff]
        %v598 = vld [vmem:[#allocation5 + $0x1d8] sm:$0xff]
        %v599 = vld [vmem:[#allocation5 + $0x1e0] sm:$0xff]
        %v600 = vld [vmem:[#allocation5 + $0x1e8] sm:$0xff]
        %v601 = vld [vmem:[#allocation5 + $0x1f0] sm:$0xff]
        %v602 = vld [vmem:[#allocation5 + $0x1f8] sm:$0xff]
        %v603 = vld [vmem:[#allocation5 + $0x200] sm:$0xff]
        %v604 = vld [vmem:[#allocation5 + $0x208] sm:$0xff]
        %v605 = vld [vmem:[#allocation5 + $0x210] sm:$0xff]
        %v606 = vld [vmem:[#allocation5 + $0x218] sm:$0xff]
        %v607 = vld [vmem:[#allocation5 + $0x220] sm:$0xff]
        %v608 = vld [vmem:[#allocation5 + $0x228] sm:$0xff]
        %v609 = vld [vmem:[#allocation5 + $0x230] sm:$0xff]
        %v610 = vld [vmem:[#allocation5 + $0x238] sm:$0xff]
        %v611 = vld [vmem:[#allocation5 + $0x240] sm:$0xff]
        %v612 = vld [vmem:[#allocation5 + $0x248] sm:$0xff]
        %v613 = vld [vmem:[#allocation5 + $0x250] sm:$0xff]
        %v614 = vld [vmem:[#allocation5 + $0x258] sm:$0xff]
        %v615 = vld [vmem:[#allocation5 + $0x260] sm:$0xff]
        %v616 = vld [vmem:[#allocation5 + $0x268] sm:$0xff]
        %v617 = vld [vmem:[#allocation5 + $0x270] sm:$0xff]
        %v618 = vld [vmem:[#allocation5 + $0x278] sm:$0xff]
        %v619 = vld [vmem:[#allocation5 + $0x280] sm:$0xff]
        %v620 = vld [vmem:[#allocation5 + $0x288] sm:$0xff]
        %v621 = vld [vmem:[#allocation5 + $0x290] sm:$0xff]
        %v622 = vld [vmem:[#allocation5 + $0x298] sm:$0xff]
        %v623 = vld [vmem:[#allocation5 + $0x2a0] sm:$0xff]
        %v624 = vld [vmem:[#allocation5 + $0x2a8] sm:$0xff]
        %v625 = vld [vmem:[#allocation5 + $0x2b0] sm:$0xff]
        %v626 = vld [vmem:[#allocation5 + $0x2b8] sm:$0xff]
        %v627 = vld [vmem:[#allocation5 + $0x2c0] sm:$0xff]
        %v628 = vld [vmem:[#allocation5 + $0x2c8] sm:$0xff]
        %v629 = vld [vmem:[#allocation5 + $0x2d0] sm:$0xff]
        %v630 = vld [vmem:[#allocation5 + $0x2d8] sm:$0xff]
        %v631 = vld [vmem:[#allocation5 + $0x2e0] sm:$0xff]
        %v632 = vld [vmem:[#allocation5 + $0x2e8] sm:$0xff]
        %v633 = vld [vmem:[#allocation5 + $0x2f0] sm:$0xff]
        %v634 = vld [vmem:[#allocation5 + $0x2f8] sm:$0xff]
        %v635 = vld [vmem:[#allocation5 + $0x300] sm:$0xff]
        %v636 = vld [vmem:[#allocation5 + $0x308] sm:$0xff]
        %v637 = vld [vmem:[#allocation5 + $0x310] sm:$0xff]
        %v638 = vld [vmem:[#allocation5 + $0x318] sm:$0xff]
        %v639 = vld [vmem:[#allocation5 + $0x320] sm:$0xff]
        %v640 = vld [vmem:[#allocation5 + $0x328] sm:$0xff]
        %v641 = vld [vmem:[#allocation5 + $0x330] sm:$0xff]
        %v642 = vld [vmem:[#allocation5 + $0x338] sm:$0xff]
        %v643 = vld [vmem:[#allocation5 + $0x340] sm:$0xff]
        %v644 = vld [vmem:[#allocation5 + $0x348] sm:$0xff]
        %v645 = vld [vmem:[#allocation5 + $0x350] sm:$0xff]
        %v646 = vld [vmem:[#allocation5 + $0x358] sm:$0xff]
        %v647 = vld [vmem:[#allocation5 + $0x360] sm:$0xff]
        %v648 = vld [vmem:[#allocation5 + $0x368] sm:$0xff]
        %v649 = vld [vmem:[#allocation5 + $0x370] sm:$0xff]
        %v650 = vld [vmem:[#allocation5 + $0x378] sm:$0xff]
        %v651 = vld [vmem:[#allocation5 + $0x380] sm:$0xff]
        %v652 = vld [vmem:[#allocation5 + $0x388] sm:$0xff]
        %v653 = vld [vmem:[#allocation5 + $0x390] sm:$0xff]
        %v654 = vld [vmem:[#allocation5 + $0x398] sm:$0xff]
        %v655 = vld [vmem:[#allocation5 + $0x3a0] sm:$0xff]
        %v656 = vld [vmem:[#allocation5 + $0x3a8] sm:$0xff]
        %v657 = vld [vmem:[#allocation5 + $0x3b0] sm:$0xff]
        %v658 = vld [vmem:[#allocation5 + $0x3b8] sm:$0xff]
        %v659 = vld [vmem:[#allocation5 + $0x3c0] sm:$0xff]
        %v660 = vld [vmem:[#allocation5 + $0x3c8] sm:$0xff]
        %v661 = vld [vmem:[#allocation5 + $0x3d0] sm:$0xff]
        %v662 = vld [vmem:[#allocation5 + $0x3d8] sm:$0xff]
        %v663 = vld [vmem:[#allocation5 + $0x3e0] sm:$0xff]
        %v664 = vld [vmem:[#allocation5 + $0x3e8] sm:$0xff]
        %v665 = vld [vmem:[#allocation5 + $0x3f0] sm:$0xff]
        %v666 = vld [vmem:[#allocation5 + $0x3f8] sm:$0xff]
        %v667 = vld [vmem:[#allocation5 + $0x400] sm:$0xff]
        %v668 = vld [vmem:[#allocation5 + $0x408] sm:$0xff]
        %v669 = vld [vmem:[#allocation5 + $0x410] sm:$0xff]
        %v670 = vld [vmem:[#allocation5 + $0x418] sm:$0xff]
        %v671 = vld [vmem:[#allocation5 + $0x420] sm:$0xff]
        %v672 = vld [vmem:[#allocation5 + $0x428] sm:$0xff]
        %v673 = vld [vmem:[#allocation5 + $0x430] sm:$0xff]
        %v674 = vld [vmem:[#allocation5 + $0x438] sm:$0xff]
        %v675 = vld [vmem:[#allocation5 + $0x440] sm:$0xff]
        %v676 = vld [vmem:[#allocation5 + $0x448] sm:$0xff]
        %v677 = vld [vmem:[#allocation5 + $0x450] sm:$0xff]
        %v678 = vld [vmem:[#allocation5 + $0x458] sm:$0xff]
        %v679 = vld [vmem:[#allocation5 + $0x460] sm:$0xff]
        %v680 = vld [vmem:[#allocation5 + $0x468] sm:$0xff]
        %v681 = vld [vmem:[#allocation5 + $0x470] sm:$0xff]
        %v682 = vld [vmem:[#allocation5 + $0x478] sm:$0xff]
        %v683 = vld [vmem:[#allocation5 + $0x480] sm:$0xff]
        %v684 = vld [vmem:[#allocation5 + $0x488] sm:$0xff]
        %v685 = vld [vmem:[#allocation5 + $0x490] sm:$0xff]
        %v686 = vld [vmem:[#allocation5 + $0x498] sm:$0xff]
        %v687 = vld [vmem:[#allocation5 + $0x4a0] sm:$0xff]
        %v688 = vld [vmem:[#allocation5 + $0x4a8] sm:$0xff]
        %v689 = vld [vmem:[#allocation5 + $0x4b0] sm:$0xff]
        %v690 = vld [vmem:[#allocation5 + $0x4b8] sm:$0xff]
        %v691 = vld [vmem:[#allocation5 + $0x4c0] sm:$0xff]
        %v692 = vld [vmem:[#allocation5 + $0x4c8] sm:$0xff]
        %v693 = vld [vmem:[#allocation5 + $0x4d0] sm:$0xff]
        %v694 = vld [vmem:[#allocation5 + $0x4d8] sm:$0xff]
        %v695 = vld [vmem:[#allocation5 + $0x4e0] sm:$0xff]
        %v696 = vld [vmem:[#allocation5 + $0x4e8] sm:$0xff]
        %v697 = vld [vmem:[#allocation5 + $0x4f0] sm:$0xff]
        %v698 = vld [vmem:[#allocation5 + $0x4f8] sm:$0xff]
        %v699 = vld [vmem:[#allocation5 + $0x500] sm:$0xff]
        %v700 = vld [vmem:[#allocation5 + $0x508] sm:$0xff]
        %v701 = vld [vmem:[#allocation5 + $0x510] sm:$0xff]
        %v702 = vld [vmem:[#allocation5 + $0x518] sm:$0xff]
        %v703 = vld [vmem:[#allocation5 + $0x520] sm:$0xff]
        %v704 = vld [vmem:[#allocation5 + $0x528] sm:$0xff]
        %v705 = vld [vmem:[#allocation5 + $0x530] sm:$0xff]
        %v706 = vld [vmem:[#allocation5 + $0x538] sm:$0xff]
        %v707 = vld [vmem:[#allocation5 + $0x540] sm:$0xff]
        %v708 = vld [vmem:[#allocation5 + $0x548] sm:$0xff]
        %v709 = vld [vmem:[#allocation5 + $0x550] sm:$0xff]
        %v710 = vld [vmem:[#allocation5 + $0x558] sm:$0xff]
        %v711 = vld [vmem:[#allocation5 + $0x560] sm:$0xff]
        %v712 = vld [vmem:[#allocation5 + $0x568] sm:$0xff]
        %v713 = vld [vmem:[#allocation5 + $0x570] sm:$0xff]
        %v714 = vld [vmem:[#allocation5 + $0x578] sm:$0xff]
        %v715 = vld [vmem:[#allocation5 + $0x580] sm:$0xff]
        %v716 = vld [vmem:[#allocation5 + $0x588] sm:$0xff]
        %v717 = vld [vmem:[#allocation5 + $0x590] sm:$0xff]
        %v718 = vld [vmem:[#allocation5 + $0x598] sm:$0xff]
        %v719 = vld [vmem:[#allocation5 + $0x5a0] sm:$0xff]
        %v720 = vld [vmem:[#allocation5 + $0x5a8] sm:$0xff]
        %v721 = vld [vmem:[#allocation5 + $0x5b0] sm:$0xff]
        %v722 = vld [vmem:[#allocation5 + $0x5b8] sm:$0xff]
        %v723 = vld [vmem:[#allocation5 + $0x5c0] sm:$0xff]
        %v724 = vld [vmem:[#allocation5 + $0x5c8] sm:$0xff]
        %v725 = vld [vmem:[#allocation5 + $0x5d0] sm:$0xff]
        %v726 = vld [vmem:[#allocation5 + $0x5d8] sm:$0xff]
        %v727 = vld [vmem:[#allocation5 + $0x5e0] sm:$0xff]
        %v728 = vld [vmem:[#allocation5 + $0x5e8] sm:$0xff]
        %v729 = vld [vmem:[#allocation5 + $0x5f0] sm:$0xff]
        %v730 = vld [vmem:[#allocation5 + $0x5f8] sm:$0xff]
        %v731 = vld [vmem:[#allocation5 + $0x600] sm:$0xff]
        %v732 = vld [vmem:[#allocation5 + $0x608] sm:$0xff]
        %v733 = vld [vmem:[#allocation5 + $0x610] sm:$0xff]
        %v734 = vld [vmem:[#allocation5 + $0x618] sm:$0xff]
        %v735 = vld [vmem:[#allocation5 + $0x620] sm:$0xff]
        %v736 = vld [vmem:[#allocation5 + $0x628] sm:$0xff]
        %v737 = vld [vmem:[#allocation5 + $0x630] sm:$0xff]
        %v738 = vld [vmem:[#allocation5 + $0x638] sm:$0xff]
        %v739 = vld [vmem:[#allocation5 + $0x640] sm:$0xff]
        %v740 = vld [vmem:[#allocation5 + $0x648] sm:$0xff]
        %v741 = vld [vmem:[#allocation5 + $0x650] sm:$0xff]
        %v742 = vld [vmem:[#allocation5 + $0x658] sm:$0xff]
        %v743 = vld [vmem:[#allocation5 + $0x660] sm:$0xff]
        %v744 = vld [vmem:[#allocation5 + $0x668] sm:$0xff]
        %v745 = vld [vmem:[#allocation5 + $0x670] sm:$0xff]
        %v746 = vld [vmem:[#allocation5 + $0x678] sm:$0xff]
        %v747 = vld [vmem:[#allocation5 + $0x680] sm:$0xff]
        %v748 = vld [vmem:[#allocation5 + $0x688] sm:$0xff]
        %v749 = vld [vmem:[#allocation5 + $0x690] sm:$0xff]
        %v750 = vld [vmem:[#allocation5 + $0x698] sm:$0xff]
        %v751 = vld [vmem:[#allocation5 + $0x6a0] sm:$0xff]
        %v752 = vld [vmem:[#allocation5 + $0x6a8] sm:$0xff]
        %v753 = vld [vmem:[#allocation5 + $0x6b0] sm:$0xff]
        %v754 = vld [vmem:[#allocation5 + $0x6b8] sm:$0xff]
        %v755 = vld [vmem:[#allocation5 + $0x6c0] sm:$0xff]
        %v756 = vld [vmem:[#allocation5 + $0x6c8] sm:$0xff]
        %v757 = vld [vmem:[#allocation5 + $0x6d0] sm:$0xff]
        %v758 = vld [vmem:[#allocation5 + $0x6d8] sm:$0xff]
        %v759 = vld [vmem:[#allocation5 + $0x6e0] sm:$0xff]
        %v760 = vld [vmem:[#allocation5 + $0x6e8] sm:$0xff]
        %v761 = vld [vmem:[#allocation5 + $0x6f0] sm:$0xff]
        %v762 = vld [vmem:[#allocation5 + $0x6f8] sm:$0xff]
        %v763 = vld [vmem:[#allocation5 + $0x700] sm:$0xff]
        %v764 = vld [vmem:[#allocation5 + $0x708] sm:$0xff]
        %v765 = vld [vmem:[#allocation5 + $0x710] sm:$0xff]
        %v766 = vld [vmem:[#allocation5 + $0x718] sm:$0xff]
        %v767 = vld [vmem:[#allocation5 + $0x720] sm:$0xff]
        %v768 = vld [vmem:[#allocation5 + $0x728] sm:$0xff]
        %v769 = vld [vmem:[#allocation5 + $0x730] sm:$0xff]
        %v770 = vld [vmem:[#allocation5 + $0x738] sm:$0xff]
        %v771 = vld [vmem:[#allocation5 + $0x740] sm:$0xff]
        %v772 = vld [vmem:[#allocation5 + $0x748] sm:$0xff]
        %v773 = vld [vmem:[#allocation5 + $0x750] sm:$0xff]
        %v774 = vld [vmem:[#allocation5 + $0x758] sm:$0xff]
        %v775 = vld [vmem:[#allocation5 + $0x760] sm:$0xff]
        %v776 = vld [vmem:[#allocation5 + $0x768] sm:$0xff]
        %v777 = vld [vmem:[#allocation5 + $0x770] sm:$0xff]
        %v778 = vld [vmem:[#allocation5 + $0x778] sm:$0xff]
        %v779 = vld [vmem:[#allocation5 + $0x780] sm:$0xff]
        %v780 = vld [vmem:[#allocation5 + $0x788] sm:$0xff]
        %v781 = vld [vmem:[#allocation5 + $0x790] sm:$0xff]
        %v782 = vld [vmem:[#allocation5 + $0x798] sm:$0xff]
        %v783 = vld [vmem:[#allocation5 + $0x7a0] sm:$0xff]
        %v784 = vld [vmem:[#allocation5 + $0x7a8] sm:$0xff]
        %v785 = vld [vmem:[#allocation5 + $0x7b0] sm:$0xff]
        %v786 = vld [vmem:[#allocation5 + $0x7b8] sm:$0xff]
        %v787 = vld [vmem:[#allocation5 + $0x7c0] sm:$0xff]
        %v788 = vld [vmem:[#allocation5 + $0x7c8] sm:$0xff]
        %v789 = vld [vmem:[#allocation5 + $0x7d0] sm:$0xff]
        %v790 = vld [vmem:[#allocation5 + $0x7d8] sm:$0xff]
        %v791 = vld [vmem:[#allocation5 + $0x7e0] sm:$0xff]
        %v792 = vld [vmem:[#allocation5 + $0x7e8] sm:$0xff]
        %v793 = vld [vmem:[#allocation5 + $0x7f0] sm:$0xff]
        %v794 = vld [vmem:[#allocation5 + $0x7f8] sm:$0xff]
        %v795 = vld [vmem:[#allocation5 + $0x800] sm:$0xff]
        %v796 = vld [vmem:[#allocation5 + $0x808] sm:$0xff]
        %v797 = vld [vmem:[#allocation5 + $0x810] sm:$0xff]
        %v798 = vld [vmem:[#allocation5 + $0x818] sm:$0xff]
        %v799 = vld [vmem:[#allocation5 + $0x820] sm:$0xff]
        %v800 = vld [vmem:[#allocation5 + $0x828] sm:$0xff]
        %v801 = vld [vmem:[#allocation5 + $0x830] sm:$0xff]
        %v802 = vld [vmem:[#allocation5 + $0x838] sm:$0xff]
        %v803 = vld [vmem:[#allocation5 + $0x840] sm:$0xff]
        %v804 = vld [vmem:[#allocation5 + $0x848] sm:$0xff]
        %v805 = vld [vmem:[#allocation5 + $0x850] sm:$0xff]
        %v806 = vld [vmem:[#allocation5 + $0x858] sm:$0xff]
        %v807 = vld [vmem:[#allocation5 + $0x860] sm:$0xff]
        %v808 = vld [vmem:[#allocation5 + $0x868] sm:$0xff]
        %v809 = vld [vmem:[#allocation5 + $0x870] sm:$0xff]
        %v810 = vld [vmem:[#allocation5 + $0x878] sm:$0xff]
        %v811 = vld [vmem:[#allocation5 + $0x880] sm:$0xff]
        %v812 = vld [vmem:[#allocation5 + $0x888] sm:$0xff]
        %v813 = vld [vmem:[#allocation5 + $0x890] sm:$0xff]
        %v814 = vld [vmem:[#allocation5 + $0x898] sm:$0xff]
        %v815 = vld [vmem:[#allocation5 + $0x8a0] sm:$0xff]
        %v816 = vld [vmem:[#allocation5 + $0x8a8] sm:$0xff]
        %v817 = vld [vmem:[#allocation5 + $0x8b0] sm:$0xff]
        %v818 = vld [vmem:[#allocation5 + $0x8b8] sm:$0xff]
        %v819 = vld [vmem:[#allocation5 + $0x8c0] sm:$0xff]
        %v820 = vld [vmem:[#allocation5 + $0x8c8] sm:$0xff]
        %v821 = vld [vmem:[#allocation5 + $0x8d0] sm:$0xff]
        %v822 = vld [vmem:[#allocation5 + $0x8d8] sm:$0xff]
        %v823 = vld [vmem:[#allocation5 + $0x8e0] sm:$0xff]
        %v824 = vld [vmem:[#allocation5 + $0x8e8] sm:$0xff]
        %v825 = vld [vmem:[#allocation5 + $0x8f0] sm:$0xff]
        %v826 = vld [vmem:[#allocation5 + $0x8f8] sm:$0xff]
        %v827 = vld [vmem:[#allocation5 + $0x900] sm:$0xff]
        %v828 = vld [vmem:[#allocation5 + $0x908] sm:$0xff]
        %v829 = vld [vmem:[#allocation5 + $0x910] sm:$0xff]
        %v830 = vld [vmem:[#allocation5 + $0x918] sm:$0xff]
        %v831 = vld [vmem:[#allocation5 + $0x920] sm:$0xff]
        %v832 = vld [vmem:[#allocation5 + $0x928] sm:$0xff]
        %v833 = vld [vmem:[#allocation5 + $0x930] sm:$0xff]
        %v834 = vld [vmem:[#allocation5 + $0x938] sm:$0xff]
        %v835 = vld [vmem:[#allocation5 + $0x940] sm:$0xff]
        %v836 = vld [vmem:[#allocation5 + $0x948] sm:$0xff]
        %v837 = vld [vmem:[#allocation5 + $0x950] sm:$0xff]
        %v838 = vld [vmem:[#allocation5 + $0x958] sm:$0xff]
        %v839 = vld [vmem:[#allocation5 + $0x960] sm:$0xff]
        %v840 = vld [vmem:[#allocation5 + $0x968] sm:$0xff]
        %v841 = vld [vmem:[#allocation5 + $0x970] sm:$0xff]
        %v842 = vld [vmem:[#allocation5 + $0x978] sm:$0xff]
        %v843 = vld [vmem:[#allocation5 + $0x980] sm:$0xff]
        %v844 = vld [vmem:[#allocation5 + $0x988] sm:$0xff]
        %v845 = vld [vmem:[#allocation5 + $0x990] sm:$0xff]
        %v846 = vld [vmem:[#allocation5 + $0x998] sm:$0xff]
        %v847 = vld [vmem:[#allocation5 + $0x9a0] sm:$0xff]
        %v848 = vld [vmem:[#allocation5 + $0x9a8] sm:$0xff]
        %v849 = vld [vmem:[#allocation5 + $0x9b0] sm:$0xff]
        %v850 = vld [vmem:[#allocation5 + $0x9b8] sm:$0xff]
        %v851 = vld [vmem:[#allocation5 + $0x9c0] sm:$0xff]
        %v852 = vld [vmem:[#allocation5 + $0x9c8] sm:$0xff]
        %v853 = vld [vmem:[#allocation5 + $0x9d0] sm:$0xff]
        %v854 = vld [vmem:[#allocation5 + $0x9d8] sm:$0xff]
        %v855 = vld [vmem:[#allocation5 + $0x9e0] sm:$0xff]
        %v856 = vld [vmem:[#allocation5 + $0x9e8] sm:$0xff]
        %v857 = vld [vmem:[#allocation5 + $0x9f0] sm:$0xff]
        %v858 = vld [vmem:[#allocation5 + $0x9f8] sm:$0xff]
        %859 = vmatprep.subr.mxu0 %v570
        %860 = vmatpush1.msra.mxu0 %v569
        %861 = vmatprep.subr.mxu0 %v568
        %862 = vmatpush1.msra.mxu0 %v567
        %863 = vmatprep.subr.mxu0 %v566
        %864 = vmatpush1.msra.mxu0 %v565
        %865 = vmatprep.subr.mxu0 %v564
        %866 = vmatpush1.msra.mxu0 %v563
        %867 = vmatprep.subr.mxu0 %v562
        %868 = vmatpush1.msra.mxu0 %v561
        %869 = vmatprep.subr.mxu0 %v560
        %870 = vmatpush1.msra.mxu0 %v559
        %871 = vmatprep.subr.mxu0 %v558
        %872 = vmatpush1.msra.mxu0 %v557
        %873 = vmatprep.subr.mxu0 %v556
        %874 = vmatpush1.msra.mxu0 %v555
        %875 = vmatprep.subr.mxu0 %v554
        %876 = vmatpush1.msra.mxu0 %v553
        %877 = vmatprep.subr.mxu0 %v552
        %878 = vmatpush1.msra.mxu0 %v551
        %879 = vmatprep.subr.mxu0 %v550
        %880 = vmatpush1.msra.mxu0 %v549
        %881 = vmatprep.subr.mxu0 %v548
        %882 = vmatpush1.msra.mxu0 %v547
        %883 = vmatprep.subr.mxu0 %v546
        %884 = vmatpush1.msra.mxu0 %v545
        %885 = vmatprep.subr.mxu0 %v544
        %886 = vmatpush1.msra.mxu0 %v543
        %887 = vmatprep.subr.mxu0 %v542
        %888 = vmatpush1.msra.mxu0 %v541
        %889 = vmatprep.subr.mxu0 %v540
        %890 = vmatpush1.msra.mxu0 %v539
        %891 = vmatprep.subr.mxu0 %v602
        %892 = vmatpush2.msra.mxu0 %v601
        %893 = vmatprep.subr.mxu0 %v600
        %894 = vmatpush2.msra.mxu0 %v599
        %895 = vmatprep.subr.mxu0 %v598
        %896 = vmatpush2.msra.mxu0 %v597
        %897 = vmatprep.subr.mxu0 %v596
        %898 = vmatpush2.msra.mxu0 %v595
        %899 = vmatprep.subr.mxu0 %v594
        %900 = vmatpush2.msra.mxu0 %v593
        %901 = vmatprep.subr.mxu0 %v592
        %902 = vmatpush2.msra.mxu0 %v591
        %903 = vmatprep.subr.mxu0 %v590
        %904 = vmatpush2.msra.mxu0 %v589
        %905 = vmatprep.subr.mxu0 %v588
        %906 = vmatpush2.msra.mxu0 %v587
        %907 = vmatprep.subr.mxu0 %v586
        %908 = vmatpush2.msra.mxu0 %v585
        %909 = vmatprep.subr.mxu0 %v584
        %910 = vmatpush2.msra.mxu0 %v583
        %911 = vmatprep.subr.mxu0 %v582
        %912 = vmatpush2.msra.mxu0 %v581
        %913 = vmatprep.subr.mxu0 %v580
        %914 = vmatpush2.msra.mxu0 %v579
        %915 = vmatprep.subr.mxu0 %v578
        %916 = vmatpush2.msra.mxu0 %v577
        %917 = vmatprep.subr.mxu0 %v576
        %918 = vmatpush2.msra.mxu0 %v575
        %919 = vmatprep.subr.mxu0 %v574
        %920 = vmatpush2.msra.mxu0 %v573
        %921 = vmatprep.subr.mxu0 %v572
        %922 = vmatpush2.msra.mxu0 %v571
        %923 = vmatprep.mubr.f32.mxu0 %v220
        %924 = vmatmul.mubr.f32.gmra.mxu0 %v219
        %v925 = vpop.f32.mrf.mxu0
        %v926 = vadd.f32 0.0, %v925
        %v927 = vpop.f32.mrf.mxu0
        %v928 = vadd.f32 0.0, %v927
        %929 = vmatprep.mubr.f32.mxu0 %v230
        %930 = vmatmul.mubr.f32.gmra.mxu0 %v229
        %v931 = vpop.f32.mrf.mxu0
        %v932 = vadd.f32 0.0, %v931
        %v933 = vpop.f32.mrf.mxu0
        %v934 = vadd.f32 0.0, %v933
        %935 = vmatprep.mubr.f32.mxu0 %v240
        %936 = vmatmul.mubr.f32.gmra.mxu0 %v239
        %v937 = vpop.f32.mrf.mxu0
        %v938 = vadd.f32 0.0, %v937
        %v939 = vpop.f32.mrf.mxu0
        %v940 = vadd.f32 0.0, %v939
        %941 = vmatprep.mubr.f32.mxu0 %v250
        %942 = vmatmul.mubr.f32.gmra.mxu0 %v249
        %v943 = vpop.f32.mrf.mxu0
        %v944 = vadd.f32 0.0, %v943
        %v945 = vpop.f32.mrf.mxu0
        %v946 = vadd.f32 0.0, %v945
        %947 = vmatprep.mubr.f32.mxu0 %v260
        %948 = vmatmul.mubr.f32.gmra.mxu0 %v259
        %v949 = vpop.f32.mrf.mxu0
        %v950 = vadd.f32 0.0, %v949
        %v951 = vpop.f32.mrf.mxu0
        %v952 = vadd.f32 0.0, %v951
        %953 = vmatprep.mubr.f32.mxu0 %v270
        %954 = vmatmul.mubr.f32.gmra.mxu0 %v269
        %v955 = vpop.f32.mrf.mxu0
        %v956 = vadd.f32 0.0, %v955
        %v957 = vpop.f32.mrf.mxu0
        %v958 = vadd.f32 0.0, %v957
        %959 = vmatprep.mubr.f32.mxu0 %v280
        %960 = vmatmul.mubr.f32.gmra.mxu0 %v279
        %v961 = vpop.f32.mrf.mxu0
        %v962 = vadd.f32 0.0, %v961
        %v963 = vpop.f32.mrf.mxu0
        %v964 = vadd.f32 0.0, %v963
        %965 = vmatprep.mubr.f32.mxu0 %v290
        %966 = vmatmul.mubr.f32.gmra.mxu0 %v289
        %v967 = vpop.f32.mrf.mxu0
        %v968 = vadd.f32 0.0, %v967
        %v969 = vpop.f32.mrf.mxu0
        %v970 = vadd.f32 0.0, %v969
        %971 = vmatprep.mubr.f32.mxu0 %v300
        %972 = vmatmul.mubr.f32.gmra.mxu0 %v299
        %v973 = vpop.f32.mrf.mxu0
        %v974 = vadd.f32 0.0, %v973
        %v975 = vpop.f32.mrf.mxu0
        %v976 = vadd.f32 0.0, %v975
        %977 = vmatprep.mubr.f32.mxu0 %v310
        %978 = vmatmul.mubr.f32.gmra.mxu0 %v309
        %v979 = vpop.f32.mrf.mxu0
        %v980 = vadd.f32 0.0, %v979
        %v981 = vpop.f32.mrf.mxu0
        %v982 = vadd.f32 0.0, %v981
        %983 = vmatprep.mubr.f32.mxu0 %v320
        %984 = vmatmul.mubr.f32.gmra.mxu0 %v319
        %v985 = vpop.f32.mrf.mxu0
        %v986 = vadd.f32 0.0, %v985
        %v987 = vpop.f32.mrf.mxu0
        %v988 = vadd.f32 0.0, %v987
        %989 = vmatprep.mubr.f32.mxu0 %v330
        %990 = vmatmul.mubr.f32.gmra.mxu0 %v329
        %v991 = vpop.f32.mrf.mxu0
        %v992 = vadd.f32 0.0, %v991
        %v993 = vpop.f32.mrf.mxu0
        %v994 = vadd.f32 0.0, %v993
        %995 = vmatprep.mubr.f32.mxu0 %v340
        %996 = vmatmul.mubr.f32.gmra.mxu0 %v339
        %v997 = vpop.f32.mrf.mxu0
        %v998 = vadd.f32 0.0, %v997
        %v999 = vpop.f32.mrf.mxu0
        %v1000 = vadd.f32 0.0, %v999
        %1001 = vmatprep.mubr.f32.mxu0 %v350
        %1002 = vmatmul.mubr.f32.gmra.mxu0 %v349
        %v1003 = vpop.f32.mrf.mxu0
        %v1004 = vadd.f32 0.0, %v1003
        %v1005 = vpop.f32.mrf.mxu0
        %v1006 = vadd.f32 0.0, %v1005
        %1007 = vmatprep.mubr.f32.mxu0 %v360
        %1008 = vmatmul.mubr.f32.gmra.mxu0 %v359
        %v1009 = vpop.f32.mrf.mxu0
        %v1010 = vadd.f32 0.0, %v1009
        %v1011 = vpop.f32.mrf.mxu0
        %v1012 = vadd.f32 0.0, %v1011
        %1013 = vmatprep.mubr.f32.mxu0 %v370
        %1014 = vmatmul.mubr.f32.gmra.mxu0 %v369
        %v1015 = vpop.f32.mrf.mxu0
        %v1016 = vadd.f32 0.0, %v1015
        %v1017 = vpop.f32.mrf.mxu0
        %v1018 = vadd.f32 0.0, %v1017
        %1019 = vmatprep.mubr.f32.mxu0 %v380
        %1020 = vmatmul.mubr.f32.gmra.mxu0 %v379
        %v1021 = vpop.f32.mrf.mxu0
        %v1022 = vadd.f32 0.0, %v1021
        %v1023 = vpop.f32.mrf.mxu0
        %v1024 = vadd.f32 0.0, %v1023
        %1025 = vmatprep.mubr.f32.mxu0 %v390
        %1026 = vmatmul.mubr.f32.gmra.mxu0 %v389
        %v1027 = vpop.f32.mrf.mxu0
        %v1028 = vadd.f32 0.0, %v1027
        %v1029 = vpop.f32.mrf.mxu0
        %v1030 = vadd.f32 0.0, %v1029
        %1031 = vmatprep.mubr.f32.mxu0 %v400
        %1032 = vmatmul.mubr.f32.gmra.mxu0 %v399
        %v1033 = vpop.f32.mrf.mxu0
        %v1034 = vadd.f32 0.0, %v1033
        %v1035 = vpop.f32.mrf.mxu0
        %v1036 = vadd.f32 0.0, %v1035
        %1037 = vmatprep.mubr.f32.mxu0 %v410
        %1038 = vmatmul.mubr.f32.gmra.mxu0 %v409
        %v1039 = vpop.f32.mrf.mxu0
        %v1040 = vadd.f32 0.0, %v1039
        %v1041 = vpop.f32.mrf.mxu0
        %v1042 = vadd.f32 0.0, %v1041
        %1043 = vmatprep.mubr.f32.mxu0 %v420
        %1044 = vmatmul.mubr.f32.gmra.mxu0 %v419
        %v1045 = vpop.f32.mrf.mxu0
        %v1046 = vadd.f32 0.0, %v1045
        %v1047 = vpop.f32.mrf.mxu0
        %v1048 = vadd.f32 0.0, %v1047
        %1049 = vmatprep.mubr.f32.mxu0 %v430
        %1050 = vmatmul.mubr.f32.gmra.mxu0 %v429
        %v1051 = vpop.f32.mrf.mxu0
        %v1052 = vadd.f32 0.0, %v1051
        %v1053 = vpop.f32.mrf.mxu0
        %v1054 = vadd.f32 0.0, %v1053
        %1055 = vmatprep.mubr.f32.mxu0 %v440
        %1056 = vmatmul.mubr.f32.gmra.mxu0 %v439
        %v1057 = vpop.f32.mrf.mxu0
        %v1058 = vadd.f32 0.0, %v1057
        %v1059 = vpop.f32.mrf.mxu0
        %v1060 = vadd.f32 0.0, %v1059
        %1061 = vmatprep.mubr.f32.mxu0 %v450
        %1062 = vmatmul.mubr.f32.gmra.mxu0 %v449
        %v1063 = vpop.f32.mrf.mxu0
        %v1064 = vadd.f32 0.0, %v1063
        %v1065 = vpop.f32.mrf.mxu0
        %v1066 = vadd.f32 0.0, %v1065
        %1067 = vmatprep.mubr.f32.mxu0 %v460
        %1068 = vmatmul.mubr.f32.gmra.mxu0 %v459
        %v1069 = vpop.f32.mrf.mxu0
        %v1070 = vadd.f32 0.0, %v1069
        %v1071 = vpop.f32.mrf.mxu0
        %v1072 = vadd.f32 0.0, %v1071
        %1073 = vmatprep.mubr.f32.mxu0 %v470
        %1074 = vmatmul.mubr.f32.gmra.mxu0 %v469
        %v1075 = vpop.f32.mrf.mxu0
        %v1076 = vadd.f32 0.0, %v1075
        %v1077 = vpop.f32.mrf.mxu0
        %v1078 = vadd.f32 0.0, %v1077
        %1079 = vmatprep.mubr.f32.mxu0 %v480
        %1080 = vmatmul.mubr.f32.gmra.mxu0 %v479
        %v1081 = vpop.f32.mrf.mxu0
        %v1082 = vadd.f32 0.0, %v1081
        %v1083 = vpop.f32.mrf.mxu0
        %v1084 = vadd.f32 0.0, %v1083
        %1085 = vmatprep.mubr.f32.mxu0 %v490
        %1086 = vmatmul.mubr.f32.gmra.mxu0 %v489
        %v1087 = vpop.f32.mrf.mxu0
        %v1088 = vadd.f32 0.0, %v1087
        %v1089 = vpop.f32.mrf.mxu0
        %v1090 = vadd.f32 0.0, %v1089
        %1091 = vmatprep.mubr.f32.mxu0 %v500
        %1092 = vmatmul.mubr.f32.gmra.mxu0 %v499
        %v1093 = vpop.f32.mrf.mxu0
        %v1094 = vadd.f32 0.0, %v1093
        %v1095 = vpop.f32.mrf.mxu0
        %v1096 = vadd.f32 0.0, %v1095
        %1097 = vmatprep.mubr.f32.mxu0 %v510
        %1098 = vmatmul.mubr.f32.gmra.mxu0 %v509
        %v1099 = vpop.f32.mrf.mxu0
        %v1100 = vadd.f32 0.0, %v1099
        %v1101 = vpop.f32.mrf.mxu0
        %v1102 = vadd.f32 0.0, %v1101
        %1103 = vmatprep.mubr.f32.mxu0 %v520
        %1104 = vmatmul.mubr.f32.gmra.mxu0 %v519
        %v1105 = vpop.f32.mrf.mxu0
        %v1106 = vadd.f32 0.0, %v1105
        %v1107 = vpop.f32.mrf.mxu0
        %v1108 = vadd.f32 0.0, %v1107
        %1109 = vmatprep.mubr.f32.mxu0 %v530
        %1110 = vmatmul.mubr.f32.gmra.mxu0 %v529
        %v1111 = vpop.f32.mrf.mxu0
        %v1112 = vadd.f32 0.0, %v1111
        %v1113 = vpop.f32.mrf.mxu0
        %v1114 = vadd.f32 0.0, %v1113
        %1115 = vdwg.mxu0
        %1116 = vmatprep.subr.mxu0 %v634
        %1117 = vmatpush1.msra.mxu0 %v633
        %1118 = vmatprep.subr.mxu0 %v632
        %1119 = vmatpush1.msra.mxu0 %v631
        %1120 = vmatprep.subr.mxu0 %v630
        %1121 = vmatpush1.msra.mxu0 %v629
        %1122 = vmatprep.subr.mxu0 %v628
        %1123 = vmatpush1.msra.mxu0 %v627
        %1124 = vmatprep.subr.mxu0 %v626
        %1125 = vmatpush1.msra.mxu0 %v625
        %1126 = vmatprep.subr.mxu0 %v624
        %1127 = vmatpush1.msra.mxu0 %v623
        %1128 = vmatprep.subr.mxu0 %v622
        %1129 = vmatpush1.msra.mxu0 %v621
        %1130 = vmatprep.subr.mxu0 %v620
        %1131 = vmatpush1.msra.mxu0 %v619
        %1132 = vmatprep.subr.mxu0 %v618
        %1133 = vmatpush1.msra.mxu0 %v617
        %1134 = vmatprep.subr.mxu0 %v616
        %1135 = vmatpush1.msra.mxu0 %v615
        %1136 = vmatprep.subr.mxu0 %v614
        %1137 = vmatpush1.msra.mxu0 %v613
        %1138 = vmatprep.subr.mxu0 %v612
        %1139 = vmatpush1.msra.mxu0 %v611
        %1140 = vmatprep.subr.mxu0 %v610
        %1141 = vmatpush1.msra.mxu0 %v609
        %1142 = vmatprep.subr.mxu0 %v608
        %1143 = vmatpush1.msra.mxu0 %v607
        %1144 = vmatprep.subr.mxu0 %v606
        %1145 = vmatpush1.msra.mxu0 %v605
        %1146 = vmatprep.subr.mxu0 %v604
        %1147 = vmatpush1.msra.mxu0 %v603
        %1148 = vmatprep.subr.mxu0 %v666
        %1149 = vmatpush2.msra.mxu0 %v665
        %1150 = vmatprep.subr.mxu0 %v664
        %1151 = vmatpush2.msra.mxu0 %v663
        %1152 = vmatprep.subr.mxu0 %v662
        %1153 = vmatpush2.msra.mxu0 %v661
        %1154 = vmatprep.subr.mxu0 %v660
        %1155 = vmatpush2.msra.mxu0 %v659
        %1156 = vmatprep.subr.mxu0 %v658
        %1157 = vmatpush2.msra.mxu0 %v657
        %1158 = vmatprep.subr.mxu0 %v656
        %1159 = vmatpush2.msra.mxu0 %v655
        %1160 = vmatprep.subr.mxu0 %v654
        %1161 = vmatpush2.msra.mxu0 %v653
        %1162 = vmatprep.subr.mxu0 %v652
        %1163 = vmatpush2.msra.mxu0 %v651
        %1164 = vmatprep.subr.mxu0 %v650
        %1165 = vmatpush2.msra.mxu0 %v649
        %1166 = vmatprep.subr.mxu0 %v648
        %1167 = vmatpush2.msra.mxu0 %v647
        %1168 = vmatprep.subr.mxu0 %v646
        %1169 = vmatpush2.msra.mxu0 %v645
        %1170 = vmatprep.subr.mxu0 %v644
        %1171 = vmatpush2.msra.mxu0 %v643
        %1172 = vmatprep.subr.mxu0 %v642
        %1173 = vmatpush2.msra.mxu0 %v641
        %1174 = vmatprep.subr.mxu0 %v640
        %1175 = vmatpush2.msra.mxu0 %v639
        %1176 = vmatprep.subr.mxu0 %v638
        %1177 = vmatpush2.msra.mxu0 %v637
        %1178 = vmatprep.subr.mxu0 %v636
        %1179 = vmatpush2.msra.mxu0 %v635
        %1180 = vmatprep.mubr.f32.mxu0 %v222
        %1181 = vmatmul.mubr.f32.gmra.mxu0 %v221
        %v1182 = vpop.f32.mrf.mxu0
        %v1183 = vadd.f32 %v926, %v1182
        %v1184 = vpop.f32.mrf.mxu0
        %v1185 = vadd.f32 %v928, %v1184
        %1186 = vmatprep.mubr.f32.mxu0 %v232
        %1187 = vmatmul.mubr.f32.gmra.mxu0 %v231
        %v1188 = vpop.f32.mrf.mxu0
        %v1189 = vadd.f32 %v932, %v1188
        %v1190 = vpop.f32.mrf.mxu0
        %v1191 = vadd.f32 %v934, %v1190
        %1192 = vmatprep.mubr.f32.mxu0 %v242
        %1193 = vmatmul.mubr.f32.gmra.mxu0 %v241
        %v1194 = vpop.f32.mrf.mxu0
        %v1195 = vadd.f32 %v938, %v1194
        %v1196 = vpop.f32.mrf.mxu0
        %v1197 = vadd.f32 %v940, %v1196
        %1198 = vmatprep.mubr.f32.mxu0 %v252
        %1199 = vmatmul.mubr.f32.gmra.mxu0 %v251
        %v1200 = vpop.f32.mrf.mxu0
        %v1201 = vadd.f32 %v944, %v1200
        %v1202 = vpop.f32.mrf.mxu0
        %v1203 = vadd.f32 %v946, %v1202
        %1204 = vmatprep.mubr.f32.mxu0 %v262
        %1205 = vmatmul.mubr.f32.gmra.mxu0 %v261
        %v1206 = vpop.f32.mrf.mxu0
        %v1207 = vadd.f32 %v950, %v1206
        %v1208 = vpop.f32.mrf.mxu0
        %v1209 = vadd.f32 %v952, %v1208
        %1210 = vmatprep.mubr.f32.mxu0 %v272
        %1211 = vmatmul.mubr.f32.gmra.mxu0 %v271
        %v1212 = vpop.f32.mrf.mxu0
        %v1213 = vadd.f32 %v956, %v1212
        %v1214 = vpop.f32.mrf.mxu0
        %v1215 = vadd.f32 %v958, %v1214
        %1216 = vmatprep.mubr.f32.mxu0 %v282
        %1217 = vmatmul.mubr.f32.gmra.mxu0 %v281
        %v1218 = vpop.f32.mrf.mxu0
        %v1219 = vadd.f32 %v962, %v1218
        %v1220 = vpop.f32.mrf.mxu0
        %v1221 = vadd.f32 %v964, %v1220
        %1222 = vmatprep.mubr.f32.mxu0 %v292
        %1223 = vmatmul.mubr.f32.gmra.mxu0 %v291
        %v1224 = vpop.f32.mrf.mxu0
        %v1225 = vadd.f32 %v968, %v1224
        %v1226 = vpop.f32.mrf.mxu0
        %v1227 = vadd.f32 %v970, %v1226
        %1228 = vmatprep.mubr.f32.mxu0 %v302
        %1229 = vmatmul.mubr.f32.gmra.mxu0 %v301
        %v1230 = vpop.f32.mrf.mxu0
        %v1231 = vadd.f32 %v974, %v1230
        %v1232 = vpop.f32.mrf.mxu0
        %v1233 = vadd.f32 %v976, %v1232
        %1234 = vmatprep.mubr.f32.mxu0 %v312
        %1235 = vmatmul.mubr.f32.gmra.mxu0 %v311
        %v1236 = vpop.f32.mrf.mxu0
        %v1237 = vadd.f32 %v980, %v1236
        %v1238 = vpop.f32.mrf.mxu0
        %v1239 = vadd.f32 %v982, %v1238
        %1240 = vmatprep.mubr.f32.mxu0 %v322
        %1241 = vmatmul.mubr.f32.gmra.mxu0 %v321
        %v1242 = vpop.f32.mrf.mxu0
        %v1243 = vadd.f32 %v986, %v1242
        %v1244 = vpop.f32.mrf.mxu0
        %v1245 = vadd.f32 %v988, %v1244
        %1246 = vmatprep.mubr.f32.mxu0 %v332
        %1247 = vmatmul.mubr.f32.gmra.mxu0 %v331
        %v1248 = vpop.f32.mrf.mxu0
        %v1249 = vadd.f32 %v992, %v1248
        %v1250 = vpop.f32.mrf.mxu0
        %v1251 = vadd.f32 %v994, %v1250
        %1252 = vmatprep.mubr.f32.mxu0 %v342
        %1253 = vmatmul.mubr.f32.gmra.mxu0 %v341
        %v1254 = vpop.f32.mrf.mxu0
        %v1255 = vadd.f32 %v998, %v1254
        %v1256 = vpop.f32.mrf.mxu0
        %v1257 = vadd.f32 %v1000, %v1256
        %1258 = vmatprep.mubr.f32.mxu0 %v352
        %1259 = vmatmul.mubr.f32.gmra.mxu0 %v351
        %v1260 = vpop.f32.mrf.mxu0
        %v1261 = vadd.f32 %v1004, %v1260
        %v1262 = vpop.f32.mrf.mxu0
        %v1263 = vadd.f32 %v1006, %v1262
        %1264 = vmatprep.mubr.f32.mxu0 %v362
        %1265 = vmatmul.mubr.f32.gmra.mxu0 %v361
        %v1266 = vpop.f32.mrf.mxu0
        %v1267 = vadd.f32 %v1010, %v1266
        %v1268 = vpop.f32.mrf.mxu0
        %v1269 = vadd.f32 %v1012, %v1268
        %1270 = vmatprep.mubr.f32.mxu0 %v372
        %1271 = vmatmul.mubr.f32.gmra.mxu0 %v371
        %v1272 = vpop.f32.mrf.mxu0
        %v1273 = vadd.f32 %v1016, %v1272
        %v1274 = vpop.f32.mrf.mxu0
        %v1275 = vadd.f32 %v1018, %v1274
        %1276 = vmatprep.mubr.f32.mxu0 %v382
        %1277 = vmatmul.mubr.f32.gmra.mxu0 %v381
        %v1278 = vpop.f32.mrf.mxu0
        %v1279 = vadd.f32 %v1022, %v1278
        %v1280 = vpop.f32.mrf.mxu0
        %v1281 = vadd.f32 %v1024, %v1280
        %1282 = vmatprep.mubr.f32.mxu0 %v392
        %1283 = vmatmul.mubr.f32.gmra.mxu0 %v391
        %v1284 = vpop.f32.mrf.mxu0
        %v1285 = vadd.f32 %v1028, %v1284
        %v1286 = vpop.f32.mrf.mxu0
        %v1287 = vadd.f32 %v1030, %v1286
        %1288 = vmatprep.mubr.f32.mxu0 %v402
        %1289 = vmatmul.mubr.f32.gmra.mxu0 %v401
        %v1290 = vpop.f32.mrf.mxu0
        %v1291 = vadd.f32 %v1034, %v1290
        %v1292 = vpop.f32.mrf.mxu0
        %v1293 = vadd.f32 %v1036, %v1292
        %1294 = vmatprep.mubr.f32.mxu0 %v412
        %1295 = vmatmul.mubr.f32.gmra.mxu0 %v411
        %v1296 = vpop.f32.mrf.mxu0
        %v1297 = vadd.f32 %v1040, %v1296
        %v1298 = vpop.f32.mrf.mxu0
        %v1299 = vadd.f32 %v1042, %v1298
        %1300 = vmatprep.mubr.f32.mxu0 %v422
        %1301 = vmatmul.mubr.f32.gmra.mxu0 %v421
        %v1302 = vpop.f32.mrf.mxu0
        %v1303 = vadd.f32 %v1046, %v1302
        %v1304 = vpop.f32.mrf.mxu0
        %v1305 = vadd.f32 %v1048, %v1304
        %1306 = vmatprep.mubr.f32.mxu0 %v432
        %1307 = vmatmul.mubr.f32.gmra.mxu0 %v431
        %v1308 = vpop.f32.mrf.mxu0
        %v1309 = vadd.f32 %v1052, %v1308
        %v1310 = vpop.f32.mrf.mxu0
        %v1311 = vadd.f32 %v1054, %v1310
        %1312 = vmatprep.mubr.f32.mxu0 %v442
        %1313 = vmatmul.mubr.f32.gmra.mxu0 %v441
        %v1314 = vpop.f32.mrf.mxu0
        %v1315 = vadd.f32 %v1058, %v1314
        %v1316 = vpop.f32.mrf.mxu0
        %v1317 = vadd.f32 %v1060, %v1316
        %1318 = vmatprep.mubr.f32.mxu0 %v452
        %1319 = vmatmul.mubr.f32.gmra.mxu0 %v451
        %v1320 = vpop.f32.mrf.mxu0
        %v1321 = vadd.f32 %v1064, %v1320
        %v1322 = vpop.f32.mrf.mxu0
        %v1323 = vadd.f32 %v1066, %v1322
        %1324 = vmatprep.mubr.f32.mxu0 %v462
        %1325 = vmatmul.mubr.f32.gmra.mxu0 %v461
        %v1326 = vpop.f32.mrf.mxu0
        %v1327 = vadd.f32 %v1070, %v1326
        %v1328 = vpop.f32.mrf.mxu0
        %v1329 = vadd.f32 %v1072, %v1328
        %1330 = vmatprep.mubr.f32.mxu0 %v472
        %1331 = vmatmul.mubr.f32.gmra.mxu0 %v471
        %v1332 = vpop.f32.mrf.mxu0
        %v1333 = vadd.f32 %v1076, %v1332
        %v1334 = vpop.f32.mrf.mxu0
        %v1335 = vadd.f32 %v1078, %v1334
        %1336 = vmatprep.mubr.f32.mxu0 %v482
        %1337 = vmatmul.mubr.f32.gmra.mxu0 %v481
        %v1338 = vpop.f32.mrf.mxu0
        %v1339 = vadd.f32 %v1082, %v1338
        %v1340 = vpop.f32.mrf.mxu0
        %v1341 = vadd.f32 %v1084, %v1340
        %1342 = vmatprep.mubr.f32.mxu0 %v492
        %1343 = vmatmul.mubr.f32.gmra.mxu0 %v491
        %v1344 = vpop.f32.mrf.mxu0
        %v1345 = vadd.f32 %v1088, %v1344
        %v1346 = vpop.f32.mrf.mxu0
        %v1347 = vadd.f32 %v1090, %v1346
        %1348 = vmatprep.mubr.f32.mxu0 %v502
        %1349 = vmatmul.mubr.f32.gmra.mxu0 %v501
        %v1350 = vpop.f32.mrf.mxu0
        %v1351 = vadd.f32 %v1094, %v1350
        %v1352 = vpop.f32.mrf.mxu0
        %v1353 = vadd.f32 %v1096, %v1352
        %1354 = vmatprep.mubr.f32.mxu0 %v512
        %1355 = vmatmul.mubr.f32.gmra.mxu0 %v511
        %v1356 = vpop.f32.mrf.mxu0
        %v1357 = vadd.f32 %v1100, %v1356
        %v1358 = vpop.f32.mrf.mxu0
        %v1359 = vadd.f32 %v1102, %v1358
        %1360 = vmatprep.mubr.f32.mxu0 %v522
        %1361 = vmatmul.mubr.f32.gmra.mxu0 %v521
        %v1362 = vpop.f32.mrf.mxu0
        %v1363 = vadd.f32 %v1106, %v1362
        %v1364 = vpop.f32.mrf.mxu0
        %v1365 = vadd.f32 %v1108, %v1364
        %1366 = vmatprep.mubr.f32.mxu0 %v532
        %1367 = vmatmul.mubr.f32.gmra.mxu0 %v531
        %v1368 = vpop.f32.mrf.mxu0
        %v1369 = vadd.f32 %v1112, %v1368
        %v1370 = vpop.f32.mrf.mxu0
        %v1371 = vadd.f32 %v1114, %v1370
        %1372 = vdwg.mxu0
        %1373 = vmatprep.subr.mxu0 %v698
        %1374 = vmatpush1.msra.mxu0 %v697
        %1375 = vmatprep.subr.mxu0 %v696
        %1376 = vmatpush1.msra.mxu0 %v695
        %1377 = vmatprep.subr.mxu0 %v694
        %1378 = vmatpush1.msra.mxu0 %v693
        %1379 = vmatprep.subr.mxu0 %v692
        %1380 = vmatpush1.msra.mxu0 %v691
        %1381 = vmatprep.subr.mxu0 %v690
        %1382 = vmatpush1.msra.mxu0 %v689
        %1383 = vmatprep.subr.mxu0 %v688
        %1384 = vmatpush1.msra.mxu0 %v687
        %1385 = vmatprep.subr.mxu0 %v686
        %1386 = vmatpush1.msra.mxu0 %v685
        %1387 = vmatprep.subr.mxu0 %v684
        %1388 = vmatpush1.msra.mxu0 %v683
        %1389 = vmatprep.subr.mxu0 %v682
        %1390 = vmatpush1.msra.mxu0 %v681
        %1391 = vmatprep.subr.mxu0 %v680
        %1392 = vmatpush1.msra.mxu0 %v679
        %1393 = vmatprep.subr.mxu0 %v678
        %1394 = vmatpush1.msra.mxu0 %v677
        %1395 = vmatprep.subr.mxu0 %v676
        %1396 = vmatpush1.msra.mxu0 %v675
        %1397 = vmatprep.subr.mxu0 %v674
        %1398 = vmatpush1.msra.mxu0 %v673
        %1399 = vmatprep.subr.mxu0 %v672
        %1400 = vmatpush1.msra.mxu0 %v671
        %1401 = vmatprep.subr.mxu0 %v670
        %1402 = vmatpush1.msra.mxu0 %v669
        %1403 = vmatprep.subr.mxu0 %v668
        %1404 = vmatpush1.msra.mxu0 %v667
        %1405 = vmatprep.subr.mxu0 %v730
        %1406 = vmatpush2.msra.mxu0 %v729
        %1407 = vmatprep.subr.mxu0 %v728
        %1408 = vmatpush2.msra.mxu0 %v727
        %1409 = vmatprep.subr.mxu0 %v726
        %1410 = vmatpush2.msra.mxu0 %v725
        %1411 = vmatprep.subr.mxu0 %v724
        %1412 = vmatpush2.msra.mxu0 %v723
        %1413 = vmatprep.subr.mxu0 %v722
        %1414 = vmatpush2.msra.mxu0 %v721
        %1415 = vmatprep.subr.mxu0 %v720
        %1416 = vmatpush2.msra.mxu0 %v719
        %1417 = vmatprep.subr.mxu0 %v718
        %1418 = vmatpush2.msra.mxu0 %v717
        %1419 = vmatprep.subr.mxu0 %v716
        %1420 = vmatpush2.msra.mxu0 %v715
        %1421 = vmatprep.subr.mxu0 %v714
        %1422 = vmatpush2.msra.mxu0 %v713
        %1423 = vmatprep.subr.mxu0 %v712
        %1424 = vmatpush2.msra.mxu0 %v711
        %1425 = vmatprep.subr.mxu0 %v710
        %1426 = vmatpush2.msra.mxu0 %v709
        %1427 = vmatprep.subr.mxu0 %v708
        %1428 = vmatpush2.msra.mxu0 %v707
        %1429 = vmatprep.subr.mxu0 %v706
        %1430 = vmatpush2.msra.mxu0 %v705
        %1431 = vmatprep.subr.mxu0 %v704
        %1432 = vmatpush2.msra.mxu0 %v703
        %1433 = vmatprep.subr.mxu0 %v702
        %1434 = vmatpush2.msra.mxu0 %v701
        %1435 = vmatprep.subr.mxu0 %v700
        %1436 = vmatpush2.msra.mxu0 %v699
        %1437 = vmatprep.mubr.f32.mxu0 %v224
        %1438 = vmatmul.mubr.f32.gmra.mxu0 %v223
        %v1439 = vpop.f32.mrf.mxu0
        %v1440 = vadd.f32 %v1183, %v1439
        %v1441 = vpop.f32.mrf.mxu0
        %v1442 = vadd.f32 %v1185, %v1441
        %1443 = vmatprep.mubr.f32.mxu0 %v234
        %1444 = vmatmul.mubr.f32.gmra.mxu0 %v233
        %v1445 = vpop.f32.mrf.mxu0
        %v1446 = vadd.f32 %v1189, %v1445
        %v1447 = vpop.f32.mrf.mxu0
        %v1448 = vadd.f32 %v1191, %v1447
        %1449 = vmatprep.mubr.f32.mxu0 %v244
        %1450 = vmatmul.mubr.f32.gmra.mxu0 %v243
        %v1451 = vpop.f32.mrf.mxu0
        %v1452 = vadd.f32 %v1195, %v1451
        %v1453 = vpop.f32.mrf.mxu0
        %v1454 = vadd.f32 %v1197, %v1453
        %1455 = vmatprep.mubr.f32.mxu0 %v254
        %1456 = vmatmul.mubr.f32.gmra.mxu0 %v253
        %v1457 = vpop.f32.mrf.mxu0
        %v1458 = vadd.f32 %v1201, %v1457
        %v1459 = vpop.f32.mrf.mxu0
        %v1460 = vadd.f32 %v1203, %v1459
        %1461 = vmatprep.mubr.f32.mxu0 %v264
        %1462 = vmatmul.mubr.f32.gmra.mxu0 %v263
        %v1463 = vpop.f32.mrf.mxu0
        %v1464 = vadd.f32 %v1207, %v1463
        %v1465 = vpop.f32.mrf.mxu0
        %v1466 = vadd.f32 %v1209, %v1465
        %1467 = vmatprep.mubr.f32.mxu0 %v274
        %1468 = vmatmul.mubr.f32.gmra.mxu0 %v273
        %v1469 = vpop.f32.mrf.mxu0
        %v1470 = vadd.f32 %v1213, %v1469
        %v1471 = vpop.f32.mrf.mxu0
        %v1472 = vadd.f32 %v1215, %v1471
        %1473 = vmatprep.mubr.f32.mxu0 %v284
        %1474 = vmatmul.mubr.f32.gmra.mxu0 %v283
        %v1475 = vpop.f32.mrf.mxu0
        %v1476 = vadd.f32 %v1219, %v1475
        %v1477 = vpop.f32.mrf.mxu0
        %v1478 = vadd.f32 %v1221, %v1477
        %1479 = vmatprep.mubr.f32.mxu0 %v294
        %1480 = vmatmul.mubr.f32.gmra.mxu0 %v293
        %v1481 = vpop.f32.mrf.mxu0
        %v1482 = vadd.f32 %v1225, %v1481
        %v1483 = vpop.f32.mrf.mxu0
        %v1484 = vadd.f32 %v1227, %v1483
        %1485 = vmatprep.mubr.f32.mxu0 %v304
        %1486 = vmatmul.mubr.f32.gmra.mxu0 %v303
        %v1487 = vpop.f32.mrf.mxu0
        %v1488 = vadd.f32 %v1231, %v1487
        %v1489 = vpop.f32.mrf.mxu0
        %v1490 = vadd.f32 %v1233, %v1489
        %1491 = vmatprep.mubr.f32.mxu0 %v314
        %1492 = vmatmul.mubr.f32.gmra.mxu0 %v313
        %v1493 = vpop.f32.mrf.mxu0
        %v1494 = vadd.f32 %v1237, %v1493
        %v1495 = vpop.f32.mrf.mxu0
        %v1496 = vadd.f32 %v1239, %v1495
        %1497 = vmatprep.mubr.f32.mxu0 %v324
        %1498 = vmatmul.mubr.f32.gmra.mxu0 %v323
        %v1499 = vpop.f32.mrf.mxu0
        %v1500 = vadd.f32 %v1243, %v1499
        %v1501 = vpop.f32.mrf.mxu0
        %v1502 = vadd.f32 %v1245, %v1501
        %1503 = vmatprep.mubr.f32.mxu0 %v334
        %1504 = vmatmul.mubr.f32.gmra.mxu0 %v333
        %v1505 = vpop.f32.mrf.mxu0
        %v1506 = vadd.f32 %v1249, %v1505
        %v1507 = vpop.f32.mrf.mxu0
        %v1508 = vadd.f32 %v1251, %v1507
        %1509 = vmatprep.mubr.f32.mxu0 %v344
        %1510 = vmatmul.mubr.f32.gmra.mxu0 %v343
        %v1511 = vpop.f32.mrf.mxu0
        %v1512 = vadd.f32 %v1255, %v1511
        %v1513 = vpop.f32.mrf.mxu0
        %v1514 = vadd.f32 %v1257, %v1513
        %1515 = vmatprep.mubr.f32.mxu0 %v354
        %1516 = vmatmul.mubr.f32.gmra.mxu0 %v353
        %v1517 = vpop.f32.mrf.mxu0
        %v1518 = vadd.f32 %v1261, %v1517
        %v1519 = vpop.f32.mrf.mxu0
        %v1520 = vadd.f32 %v1263, %v1519
        %1521 = vmatprep.mubr.f32.mxu0 %v364
        %1522 = vmatmul.mubr.f32.gmra.mxu0 %v363
        %v1523 = vpop.f32.mrf.mxu0
        %v1524 = vadd.f32 %v1267, %v1523
        %v1525 = vpop.f32.mrf.mxu0
        %v1526 = vadd.f32 %v1269, %v1525
        %1527 = vmatprep.mubr.f32.mxu0 %v374
        %1528 = vmatmul.mubr.f32.gmra.mxu0 %v373
        %v1529 = vpop.f32.mrf.mxu0
        %v1530 = vadd.f32 %v1273, %v1529
        %v1531 = vpop.f32.mrf.mxu0
        %v1532 = vadd.f32 %v1275, %v1531
        %1533 = vmatprep.mubr.f32.mxu0 %v384
        %1534 = vmatmul.mubr.f32.gmra.mxu0 %v383
        %v1535 = vpop.f32.mrf.mxu0
        %v1536 = vadd.f32 %v1279, %v1535
        %v1537 = vpop.f32.mrf.mxu0
        %v1538 = vadd.f32 %v1281, %v1537
        %1539 = vmatprep.mubr.f32.mxu0 %v394
        %1540 = vmatmul.mubr.f32.gmra.mxu0 %v393
        %v1541 = vpop.f32.mrf.mxu0
        %v1542 = vadd.f32 %v1285, %v1541
        %v1543 = vpop.f32.mrf.mxu0
        %v1544 = vadd.f32 %v1287, %v1543
        %1545 = vmatprep.mubr.f32.mxu0 %v404
        %1546 = vmatmul.mubr.f32.gmra.mxu0 %v403
        %v1547 = vpop.f32.mrf.mxu0
        %v1548 = vadd.f32 %v1291, %v1547
        %v1549 = vpop.f32.mrf.mxu0
        %v1550 = vadd.f32 %v1293, %v1549
        %1551 = vmatprep.mubr.f32.mxu0 %v414
        %1552 = vmatmul.mubr.f32.gmra.mxu0 %v413
        %v1553 = vpop.f32.mrf.mxu0
        %v1554 = vadd.f32 %v1297, %v1553
        %v1555 = vpop.f32.mrf.mxu0
        %v1556 = vadd.f32 %v1299, %v1555
        %1557 = vmatprep.mubr.f32.mxu0 %v424
        %1558 = vmatmul.mubr.f32.gmra.mxu0 %v423
        %v1559 = vpop.f32.mrf.mxu0
        %v1560 = vadd.f32 %v1303, %v1559
        %v1561 = vpop.f32.mrf.mxu0
        %v1562 = vadd.f32 %v1305, %v1561
        %1563 = vmatprep.mubr.f32.mxu0 %v434
        %1564 = vmatmul.mubr.f32.gmra.mxu0 %v433
        %v1565 = vpop.f32.mrf.mxu0
        %v1566 = vadd.f32 %v1309, %v1565
        %v1567 = vpop.f32.mrf.mxu0
        %v1568 = vadd.f32 %v1311, %v1567
        %1569 = vmatprep.mubr.f32.mxu0 %v444
        %1570 = vmatmul.mubr.f32.gmra.mxu0 %v443
        %v1571 = vpop.f32.mrf.mxu0
        %v1572 = vadd.f32 %v1315, %v1571
        %v1573 = vpop.f32.mrf.mxu0
        %v1574 = vadd.f32 %v1317, %v1573
        %1575 = vmatprep.mubr.f32.mxu0 %v454
        %1576 = vmatmul.mubr.f32.gmra.mxu0 %v453
        %v1577 = vpop.f32.mrf.mxu0
        %v1578 = vadd.f32 %v1321, %v1577
        %v1579 = vpop.f32.mrf.mxu0
        %v1580 = vadd.f32 %v1323, %v1579
        %1581 = vmatprep.mubr.f32.mxu0 %v464
        %1582 = vmatmul.mubr.f32.gmra.mxu0 %v463
        %v1583 = vpop.f32.mrf.mxu0
        %v1584 = vadd.f32 %v1327, %v1583
        %v1585 = vpop.f32.mrf.mxu0
        %v1586 = vadd.f32 %v1329, %v1585
        %1587 = vmatprep.mubr.f32.mxu0 %v474
        %1588 = vmatmul.mubr.f32.gmra.mxu0 %v473
        %v1589 = vpop.f32.mrf.mxu0
        %v1590 = vadd.f32 %v1333, %v1589
        %v1591 = vpop.f32.mrf.mxu0
        %v1592 = vadd.f32 %v1335, %v1591
        %1593 = vmatprep.mubr.f32.mxu0 %v484
        %1594 = vmatmul.mubr.f32.gmra.mxu0 %v483
        %v1595 = vpop.f32.mrf.mxu0
        %v1596 = vadd.f32 %v1339, %v1595
        %v1597 = vpop.f32.mrf.mxu0
        %v1598 = vadd.f32 %v1341, %v1597
        %1599 = vmatprep.mubr.f32.mxu0 %v494
        %1600 = vmatmul.mubr.f32.gmra.mxu0 %v493
        %v1601 = vpop.f32.mrf.mxu0
        %v1602 = vadd.f32 %v1345, %v1601
        %v1603 = vpop.f32.mrf.mxu0
        %v1604 = vadd.f32 %v1347, %v1603
        %1605 = vmatprep.mubr.f32.mxu0 %v504
        %1606 = vmatmul.mubr.f32.gmra.mxu0 %v503
        %v1607 = vpop.f32.mrf.mxu0
        %v1608 = vadd.f32 %v1351, %v1607
        %v1609 = vpop.f32.mrf.mxu0
        %v1610 = vadd.f32 %v1353, %v1609
        %1611 = vmatprep.mubr.f32.mxu0 %v514
        %1612 = vmatmul.mubr.f32.gmra.mxu0 %v513
        %v1613 = vpop.f32.mrf.mxu0
        %v1614 = vadd.f32 %v1357, %v1613
        %v1615 = vpop.f32.mrf.mxu0
        %v1616 = vadd.f32 %v1359, %v1615
        %1617 = vmatprep.mubr.f32.mxu0 %v524
        %1618 = vmatmul.mubr.f32.gmra.mxu0 %v523
        %v1619 = vpop.f32.mrf.mxu0
        %v1620 = vadd.f32 %v1363, %v1619
        %v1621 = vpop.f32.mrf.mxu0
        %v1622 = vadd.f32 %v1365, %v1621
        %1623 = vmatprep.mubr.f32.mxu0 %v534
        %1624 = vmatmul.mubr.f32.gmra.mxu0 %v533
        %v1625 = vpop.f32.mrf.mxu0
        %v1626 = vadd.f32 %v1369, %v1625
        %v1627 = vpop.f32.mrf.mxu0
        %v1628 = vadd.f32 %v1371, %v1627
        %1629 = vdwg.mxu0
        %1630 = vmatprep.subr.mxu0 %v762
        %1631 = vmatpush1.msra.mxu0 %v761
        %1632 = vmatprep.subr.mxu0 %v760
        %1633 = vmatpush1.msra.mxu0 %v759
        %1634 = vmatprep.subr.mxu0 %v758
        %1635 = vmatpush1.msra.mxu0 %v757
        %1636 = vmatprep.subr.mxu0 %v756
        %1637 = vmatpush1.msra.mxu0 %v755
        %1638 = vmatprep.subr.mxu0 %v754
        %1639 = vmatpush1.msra.mxu0 %v753
        %1640 = vmatprep.subr.mxu0 %v752
        %1641 = vmatpush1.msra.mxu0 %v751
        %1642 = vmatprep.subr.mxu0 %v750
        %1643 = vmatpush1.msra.mxu0 %v749
        %1644 = vmatprep.subr.mxu0 %v748
        %1645 = vmatpush1.msra.mxu0 %v747
        %1646 = vmatprep.subr.mxu0 %v746
        %1647 = vmatpush1.msra.mxu0 %v745
        %1648 = vmatprep.subr.mxu0 %v744
        %1649 = vmatpush1.msra.mxu0 %v743
        %1650 = vmatprep.subr.mxu0 %v742
        %1651 = vmatpush1.msra.mxu0 %v741
        %1652 = vmatprep.subr.mxu0 %v740
        %1653 = vmatpush1.msra.mxu0 %v739
        %1654 = vmatprep.subr.mxu0 %v738
        %1655 = vmatpush1.msra.mxu0 %v737
        %1656 = vmatprep.subr.mxu0 %v736
        %1657 = vmatpush1.msra.mxu0 %v735
        %1658 = vmatprep.subr.mxu0 %v734
        %1659 = vmatpush1.msra.mxu0 %v733
        %1660 = vmatprep.subr.mxu0 %v732
        %1661 = vmatpush1.msra.mxu0 %v731
        %1662 = vmatprep.subr.mxu0 %v794
        %1663 = vmatpush2.msra.mxu0 %v793
        %1664 = vmatprep.subr.mxu0 %v792
        %1665 = vmatpush2.msra.mxu0 %v791
        %1666 = vmatprep.subr.mxu0 %v790
        %1667 = vmatpush2.msra.mxu0 %v789
        %1668 = vmatprep.subr.mxu0 %v788
        %1669 = vmatpush2.msra.mxu0 %v787
        %1670 = vmatprep.subr.mxu0 %v786
        %1671 = vmatpush2.msra.mxu0 %v785
        %1672 = vmatprep.subr.mxu0 %v784
        %1673 = vmatpush2.msra.mxu0 %v783
        %1674 = vmatprep.subr.mxu0 %v782
        %1675 = vmatpush2.msra.mxu0 %v781
        %1676 = vmatprep.subr.mxu0 %v780
        %1677 = vmatpush2.msra.mxu0 %v779
        %1678 = vmatprep.subr.mxu0 %v778
        %1679 = vmatpush2.msra.mxu0 %v777
        %1680 = vmatprep.subr.mxu0 %v776
        %1681 = vmatpush2.msra.mxu0 %v775
        %1682 = vmatprep.subr.mxu0 %v774
        %1683 = vmatpush2.msra.mxu0 %v773
        %1684 = vmatprep.subr.mxu0 %v772
        %1685 = vmatpush2.msra.mxu0 %v771
        %1686 = vmatprep.subr.mxu0 %v770
        %1687 = vmatpush2.msra.mxu0 %v769
        %1688 = vmatprep.subr.mxu0 %v768
        %1689 = vmatpush2.msra.mxu0 %v767
        %1690 = vmatprep.subr.mxu0 %v766
        %1691 = vmatpush2.msra.mxu0 %v765
        %1692 = vmatprep.subr.mxu0 %v764
        %1693 = vmatpush2.msra.mxu0 %v763
        %1694 = vmatprep.mubr.f32.mxu0 %v226
        %1695 = vmatmul.mubr.f32.gmra.mxu0 %v225
        %v1696 = vpop.f32.mrf.mxu0
        %v1697 = vadd.f32 %v1440, %v1696
        %v1698 = vpop.f32.mrf.mxu0
        %v1699 = vadd.f32 %v1442, %v1698
        %1700 = vmatprep.mubr.f32.mxu0 %v236
        %1701 = vmatmul.mubr.f32.gmra.mxu0 %v235
        %v1702 = vpop.f32.mrf.mxu0
        %v1703 = vadd.f32 %v1446, %v1702
        %v1704 = vpop.f32.mrf.mxu0
        %v1705 = vadd.f32 %v1448, %v1704
        %1706 = vmatprep.mubr.f32.mxu0 %v246
        %1707 = vmatmul.mubr.f32.gmra.mxu0 %v245
        %v1708 = vpop.f32.mrf.mxu0
        %v1709 = vadd.f32 %v1452, %v1708
        %v1710 = vpop.f32.mrf.mxu0
        %v1711 = vadd.f32 %v1454, %v1710
        %1712 = vmatprep.mubr.f32.mxu0 %v256
        %1713 = vmatmul.mubr.f32.gmra.mxu0 %v255
        %v1714 = vpop.f32.mrf.mxu0
        %v1715 = vadd.f32 %v1458, %v1714
        %v1716 = vpop.f32.mrf.mxu0
        %v1717 = vadd.f32 %v1460, %v1716
        %1718 = vmatprep.mubr.f32.mxu0 %v266
        %1719 = vmatmul.mubr.f32.gmra.mxu0 %v265
        %v1720 = vpop.f32.mrf.mxu0
        %v1721 = vadd.f32 %v1464, %v1720
        %v1722 = vpop.f32.mrf.mxu0
        %v1723 = vadd.f32 %v1466, %v1722
        %1724 = vmatprep.mubr.f32.mxu0 %v276
        %1725 = vmatmul.mubr.f32.gmra.mxu0 %v275
        %v1726 = vpop.f32.mrf.mxu0
        %v1727 = vadd.f32 %v1470, %v1726
        %v1728 = vpop.f32.mrf.mxu0
        %v1729 = vadd.f32 %v1472, %v1728
        %1730 = vmatprep.mubr.f32.mxu0 %v286
        %1731 = vmatmul.mubr.f32.gmra.mxu0 %v285
        %v1732 = vpop.f32.mrf.mxu0
        %v1733 = vadd.f32 %v1476, %v1732
        %v1734 = vpop.f32.mrf.mxu0
        %v1735 = vadd.f32 %v1478, %v1734
        %1736 = vmatprep.mubr.f32.mxu0 %v296
        %1737 = vmatmul.mubr.f32.gmra.mxu0 %v295
        %v1738 = vpop.f32.mrf.mxu0
        %v1739 = vadd.f32 %v1482, %v1738
        %v1740 = vpop.f32.mrf.mxu0
        %v1741 = vadd.f32 %v1484, %v1740
        %1742 = vmatprep.mubr.f32.mxu0 %v306
        %1743 = vmatmul.mubr.f32.gmra.mxu0 %v305
        %v1744 = vpop.f32.mrf.mxu0
        %v1745 = vadd.f32 %v1488, %v1744
        %v1746 = vpop.f32.mrf.mxu0
        %v1747 = vadd.f32 %v1490, %v1746
        %1748 = vmatprep.mubr.f32.mxu0 %v316
        %1749 = vmatmul.mubr.f32.gmra.mxu0 %v315
        %v1750 = vpop.f32.mrf.mxu0
        %v1751 = vadd.f32 %v1494, %v1750
        %v1752 = vpop.f32.mrf.mxu0
        %v1753 = vadd.f32 %v1496, %v1752
        %1754 = vmatprep.mubr.f32.mxu0 %v326
        %1755 = vmatmul.mubr.f32.gmra.mxu0 %v325
        %v1756 = vpop.f32.mrf.mxu0
        %v1757 = vadd.f32 %v1500, %v1756
        %v1758 = vpop.f32.mrf.mxu0
        %v1759 = vadd.f32 %v1502, %v1758
        %1760 = vmatprep.mubr.f32.mxu0 %v336
        %1761 = vmatmul.mubr.f32.gmra.mxu0 %v335
        %v1762 = vpop.f32.mrf.mxu0
        %v1763 = vadd.f32 %v1506, %v1762
        %v1764 = vpop.f32.mrf.mxu0
        %v1765 = vadd.f32 %v1508, %v1764
        %1766 = vmatprep.mubr.f32.mxu0 %v346
        %1767 = vmatmul.mubr.f32.gmra.mxu0 %v345
        %v1768 = vpop.f32.mrf.mxu0
        %v1769 = vadd.f32 %v1512, %v1768
        %v1770 = vpop.f32.mrf.mxu0
        %v1771 = vadd.f32 %v1514, %v1770
        %1772 = vmatprep.mubr.f32.mxu0 %v356
        %1773 = vmatmul.mubr.f32.gmra.mxu0 %v355
        %v1774 = vpop.f32.mrf.mxu0
        %v1775 = vadd.f32 %v1518, %v1774
        %v1776 = vpop.f32.mrf.mxu0
        %v1777 = vadd.f32 %v1520, %v1776
        %1778 = vmatprep.mubr.f32.mxu0 %v366
        %1779 = vmatmul.mubr.f32.gmra.mxu0 %v365
        %v1780 = vpop.f32.mrf.mxu0
        %v1781 = vadd.f32 %v1524, %v1780
        %v1782 = vpop.f32.mrf.mxu0
        %v1783 = vadd.f32 %v1526, %v1782
        %1784 = vmatprep.mubr.f32.mxu0 %v376
        %1785 = vmatmul.mubr.f32.gmra.mxu0 %v375
        %v1786 = vpop.f32.mrf.mxu0
        %v1787 = vadd.f32 %v1530, %v1786
        %v1788 = vpop.f32.mrf.mxu0
        %v1789 = vadd.f32 %v1532, %v1788
        %1790 = vmatprep.mubr.f32.mxu0 %v386
        %1791 = vmatmul.mubr.f32.gmra.mxu0 %v385
        %v1792 = vpop.f32.mrf.mxu0
        %v1793 = vadd.f32 %v1536, %v1792
        %v1794 = vpop.f32.mrf.mxu0
        %v1795 = vadd.f32 %v1538, %v1794
        %1796 = vmatprep.mubr.f32.mxu0 %v396
        %1797 = vmatmul.mubr.f32.gmra.mxu0 %v395
        %v1798 = vpop.f32.mrf.mxu0
        %v1799 = vadd.f32 %v1542, %v1798
        %v1800 = vpop.f32.mrf.mxu0
        %v1801 = vadd.f32 %v1544, %v1800
        %1802 = vmatprep.mubr.f32.mxu0 %v406
        %1803 = vmatmul.mubr.f32.gmra.mxu0 %v405
        %v1804 = vpop.f32.mrf.mxu0
        %v1805 = vadd.f32 %v1548, %v1804
        %v1806 = vpop.f32.mrf.mxu0
        %v1807 = vadd.f32 %v1550, %v1806
        %1808 = vmatprep.mubr.f32.mxu0 %v416
        %1809 = vmatmul.mubr.f32.gmra.mxu0 %v415
        %v1810 = vpop.f32.mrf.mxu0
        %v1811 = vadd.f32 %v1554, %v1810
        %v1812 = vpop.f32.mrf.mxu0
        %v1813 = vadd.f32 %v1556, %v1812
        %1814 = vmatprep.mubr.f32.mxu0 %v426
        %1815 = vmatmul.mubr.f32.gmra.mxu0 %v425
        %v1816 = vpop.f32.mrf.mxu0
        %v1817 = vadd.f32 %v1560, %v1816
        %v1818 = vpop.f32.mrf.mxu0
        %v1819 = vadd.f32 %v1562, %v1818
        %1820 = vmatprep.mubr.f32.mxu0 %v436
        %1821 = vmatmul.mubr.f32.gmra.mxu0 %v435
        %v1822 = vpop.f32.mrf.mxu0
        %v1823 = vadd.f32 %v1566, %v1822
        %v1824 = vpop.f32.mrf.mxu0
        %v1825 = vadd.f32 %v1568, %v1824
        %1826 = vmatprep.mubr.f32.mxu0 %v446
        %1827 = vmatmul.mubr.f32.gmra.mxu0 %v445
        %v1828 = vpop.f32.mrf.mxu0
        %v1829 = vadd.f32 %v1572, %v1828
        %v1830 = vpop.f32.mrf.mxu0
        %v1831 = vadd.f32 %v1574, %v1830
        %1832 = vmatprep.mubr.f32.mxu0 %v456
        %1833 = vmatmul.mubr.f32.gmra.mxu0 %v455
        %v1834 = vpop.f32.mrf.mxu0
        %v1835 = vadd.f32 %v1578, %v1834
        %v1836 = vpop.f32.mrf.mxu0
        %v1837 = vadd.f32 %v1580, %v1836
        %1838 = vmatprep.mubr.f32.mxu0 %v466
        %1839 = vmatmul.mubr.f32.gmra.mxu0 %v465
        %v1840 = vpop.f32.mrf.mxu0
        %v1841 = vadd.f32 %v1584, %v1840
        %v1842 = vpop.f32.mrf.mxu0
        %v1843 = vadd.f32 %v1586, %v1842
        %1844 = vmatprep.mubr.f32.mxu0 %v476
        %1845 = vmatmul.mubr.f32.gmra.mxu0 %v475
        %v1846 = vpop.f32.mrf.mxu0
        %v1847 = vadd.f32 %v1590, %v1846
        %v1848 = vpop.f32.mrf.mxu0
        %v1849 = vadd.f32 %v1592, %v1848
        %1850 = vmatprep.mubr.f32.mxu0 %v486
        %1851 = vmatmul.mubr.f32.gmra.mxu0 %v485
        %v1852 = vpop.f32.mrf.mxu0
        %v1853 = vadd.f32 %v1596, %v1852
        %v1854 = vpop.f32.mrf.mxu0
        %v1855 = vadd.f32 %v1598, %v1854
        %1856 = vmatprep.mubr.f32.mxu0 %v496
        %1857 = vmatmul.mubr.f32.gmra.mxu0 %v495
        %v1858 = vpop.f32.mrf.mxu0
        %v1859 = vadd.f32 %v1602, %v1858
        %v1860 = vpop.f32.mrf.mxu0
        %v1861 = vadd.f32 %v1604, %v1860
        %1862 = vmatprep.mubr.f32.mxu0 %v506
        %1863 = vmatmul.mubr.f32.gmra.mxu0 %v505
        %v1864 = vpop.f32.mrf.mxu0
        %v1865 = vadd.f32 %v1608, %v1864
        %v1866 = vpop.f32.mrf.mxu0
        %v1867 = vadd.f32 %v1610, %v1866
        %1868 = vmatprep.mubr.f32.mxu0 %v516
        %1869 = vmatmul.mubr.f32.gmra.mxu0 %v515
        %v1870 = vpop.f32.mrf.mxu0
        %v1871 = vadd.f32 %v1614, %v1870
        %v1872 = vpop.f32.mrf.mxu0
        %v1873 = vadd.f32 %v1616, %v1872
        %1874 = vmatprep.mubr.f32.mxu0 %v526
        %1875 = vmatmul.mubr.f32.gmra.mxu0 %v525
        %v1876 = vpop.f32.mrf.mxu0
        %v1877 = vadd.f32 %v1620, %v1876
        %v1878 = vpop.f32.mrf.mxu0
        %v1879 = vadd.f32 %v1622, %v1878
        %1880 = vmatprep.mubr.f32.mxu0 %v536
        %1881 = vmatmul.mubr.f32.gmra.mxu0 %v535
        %v1882 = vpop.f32.mrf.mxu0
        %v1883 = vadd.f32 %v1626, %v1882
        %v1884 = vpop.f32.mrf.mxu0
        %v1885 = vadd.f32 %v1628, %v1884
        %1886 = vdwg.mxu0
        %1887 = vmatprep.subr.mxu0 %v826
        %1888 = vmatpush1.msra.mxu0 %v825
        %1889 = vmatprep.subr.mxu0 %v824
        %1890 = vmatpush1.msra.mxu0 %v823
        %1891 = vmatprep.subr.mxu0 %v822
        %1892 = vmatpush1.msra.mxu0 %v821
        %1893 = vmatprep.subr.mxu0 %v820
        %1894 = vmatpush1.msra.mxu0 %v819
        %1895 = vmatprep.subr.mxu0 %v818
        %1896 = vmatpush1.msra.mxu0 %v817
        %1897 = vmatprep.subr.mxu0 %v816
        %1898 = vmatpush1.msra.mxu0 %v815
        %1899 = vmatprep.subr.mxu0 %v814
        %1900 = vmatpush1.msra.mxu0 %v813
        %1901 = vmatprep.subr.mxu0 %v812
        %1902 = vmatpush1.msra.mxu0 %v811
        %1903 = vmatprep.subr.mxu0 %v810
        %1904 = vmatpush1.msra.mxu0 %v809
        %1905 = vmatprep.subr.mxu0 %v808
        %1906 = vmatpush1.msra.mxu0 %v807
        %1907 = vmatprep.subr.mxu0 %v806
        %1908 = vmatpush1.msra.mxu0 %v805
        %1909 = vmatprep.subr.mxu0 %v804
        %1910 = vmatpush1.msra.mxu0 %v803
        %1911 = vmatprep.subr.mxu0 %v802
        %1912 = vmatpush1.msra.mxu0 %v801
        %1913 = vmatprep.subr.mxu0 %v800
        %1914 = vmatpush1.msra.mxu0 %v799
        %1915 = vmatprep.subr.mxu0 %v798
        %1916 = vmatpush1.msra.mxu0 %v797
        %1917 = vmatprep.subr.mxu0 %v796
        %1918 = vmatpush1.msra.mxu0 %v795
        %1919 = vmatprep.subr.mxu0 %v858
        %1920 = vmatpush2.msra.mxu0 %v857
        %1921 = vmatprep.subr.mxu0 %v856
        %1922 = vmatpush2.msra.mxu0 %v855
        %1923 = vmatprep.subr.mxu0 %v854
        %1924 = vmatpush2.msra.mxu0 %v853
        %1925 = vmatprep.subr.mxu0 %v852
        %1926 = vmatpush2.msra.mxu0 %v851
        %1927 = vmatprep.subr.mxu0 %v850
        %1928 = vmatpush2.msra.mxu0 %v849
        %1929 = vmatprep.subr.mxu0 %v848
        %1930 = vmatpush2.msra.mxu0 %v847
        %1931 = vmatprep.subr.mxu0 %v846
        %1932 = vmatpush2.msra.mxu0 %v845
        %1933 = vmatprep.subr.mxu0 %v844
        %1934 = vmatpush2.msra.mxu0 %v843
        %1935 = vmatprep.subr.mxu0 %v842
        %1936 = vmatpush2.msra.mxu0 %v841
        %1937 = vmatprep.subr.mxu0 %v840
        %1938 = vmatpush2.msra.mxu0 %v839
        %1939 = vmatprep.subr.mxu0 %v838
        %1940 = vmatpush2.msra.mxu0 %v837
        %1941 = vmatprep.subr.mxu0 %v836
        %1942 = vmatpush2.msra.mxu0 %v835
        %1943 = vmatprep.subr.mxu0 %v834
        %1944 = vmatpush2.msra.mxu0 %v833
        %1945 = vmatprep.subr.mxu0 %v832
        %1946 = vmatpush2.msra.mxu0 %v831
        %1947 = vmatprep.subr.mxu0 %v830
        %1948 = vmatpush2.msra.mxu0 %v829
        %1949 = vmatprep.subr.mxu0 %v828
        %1950 = vmatpush2.msra.mxu0 %v827
        %1951 = vmatprep.mubr.f32.mxu0 %v228
        %1952 = vmatmul.mubr.f32.gmra.mxu0 %v227
        %v1953 = vpop.f32.mrf.mxu0
        %v1954 = vadd.f32 %v1697, %v1953
        %v1955 = vpop.f32.mrf.mxu0
        %v1956 = vadd.f32 %v1699, %v1955
        %1957 = vmatprep.mubr.f32.mxu0 %v238
        %1958 = vmatmul.mubr.f32.gmra.mxu0 %v237
        %v1959 = vpop.f32.mrf.mxu0
        %v1960 = vadd.f32 %v1703, %v1959
        %v1961 = vpop.f32.mrf.mxu0
        %v1962 = vadd.f32 %v1705, %v1961
        %1963 = vmatprep.mubr.f32.mxu0 %v248
        %1964 = vmatmul.mubr.f32.gmra.mxu0 %v247
        %v1965 = vpop.f32.mrf.mxu0
        %v1966 = vadd.f32 %v1709, %v1965
        %v1967 = vpop.f32.mrf.mxu0
        %v1968 = vadd.f32 %v1711, %v1967
        %1969 = vmatprep.mubr.f32.mxu0 %v258
        %1970 = vmatmul.mubr.f32.gmra.mxu0 %v257
        %v1971 = vpop.f32.mrf.mxu0
        %v1972 = vadd.f32 %v1715, %v1971
        %v1973 = vpop.f32.mrf.mxu0
        %v1974 = vadd.f32 %v1717, %v1973
        %1975 = vmatprep.mubr.f32.mxu0 %v268
        %1976 = vmatmul.mubr.f32.gmra.mxu0 %v267
        %v1977 = vpop.f32.mrf.mxu0
        %v1978 = vadd.f32 %v1721, %v1977
        %v1979 = vpop.f32.mrf.mxu0
        %v1980 = vadd.f32 %v1723, %v1979
        %1981 = vmatprep.mubr.f32.mxu0 %v278
        %1982 = vmatmul.mubr.f32.gmra.mxu0 %v277
        %v1983 = vpop.f32.mrf.mxu0
        %v1984 = vadd.f32 %v1727, %v1983
        %v1985 = vpop.f32.mrf.mxu0
        %v1986 = vadd.f32 %v1729, %v1985
        %1987 = vmatprep.mubr.f32.mxu0 %v288
        %1988 = vmatmul.mubr.f32.gmra.mxu0 %v287
        %v1989 = vpop.f32.mrf.mxu0
        %v1990 = vadd.f32 %v1733, %v1989
        %v1991 = vpop.f32.mrf.mxu0
        %v1992 = vadd.f32 %v1735, %v1991
        %1993 = vmatprep.mubr.f32.mxu0 %v298
        %1994 = vmatmul.mubr.f32.gmra.mxu0 %v297
        %v1995 = vpop.f32.mrf.mxu0
        %v1996 = vadd.f32 %v1739, %v1995
        %v1997 = vpop.f32.mrf.mxu0
        %v1998 = vadd.f32 %v1741, %v1997
        %1999 = vmatprep.mubr.f32.mxu0 %v308
        %2000 = vmatmul.mubr.f32.gmra.mxu0 %v307
        %v2001 = vpop.f32.mrf.mxu0
        %v2002 = vadd.f32 %v1745, %v2001
        %v2003 = vpop.f32.mrf.mxu0
        %v2004 = vadd.f32 %v1747, %v2003
        %2005 = vmatprep.mubr.f32.mxu0 %v318
        %2006 = vmatmul.mubr.f32.gmra.mxu0 %v317
        %v2007 = vpop.f32.mrf.mxu0
        %v2008 = vadd.f32 %v1751, %v2007
        %v2009 = vpop.f32.mrf.mxu0
        %v2010 = vadd.f32 %v1753, %v2009
        %2011 = vmatprep.mubr.f32.mxu0 %v328
        %2012 = vmatmul.mubr.f32.gmra.mxu0 %v327
        %v2013 = vpop.f32.mrf.mxu0
        %v2014 = vadd.f32 %v1757, %v2013
        %v2015 = vpop.f32.mrf.mxu0
        %v2016 = vadd.f32 %v1759, %v2015
        %2017 = vmatprep.mubr.f32.mxu0 %v338
        %2018 = vmatmul.mubr.f32.gmra.mxu0 %v337
        %v2019 = vpop.f32.mrf.mxu0
        %v2020 = vadd.f32 %v1763, %v2019
        %v2021 = vpop.f32.mrf.mxu0
        %v2022 = vadd.f32 %v1765, %v2021
        %2023 = vmatprep.mubr.f32.mxu0 %v348
        %2024 = vmatmul.mubr.f32.gmra.mxu0 %v347
        %v2025 = vpop.f32.mrf.mxu0
        %v2026 = vadd.f32 %v1769, %v2025
        %v2027 = vpop.f32.mrf.mxu0
        %v2028 = vadd.f32 %v1771, %v2027
        %2029 = vmatprep.mubr.f32.mxu0 %v358
        %2030 = vmatmul.mubr.f32.gmra.mxu0 %v357
        %v2031 = vpop.f32.mrf.mxu0
        %v2032 = vadd.f32 %v1775, %v2031
        %v2033 = vpop.f32.mrf.mxu0
        %v2034 = vadd.f32 %v1777, %v2033
        %2035 = vmatprep.mubr.f32.mxu0 %v368
        %2036 = vmatmul.mubr.f32.gmra.mxu0 %v367
        %v2037 = vpop.f32.mrf.mxu0
        %v2038 = vadd.f32 %v1781, %v2037
        %v2039 = vpop.f32.mrf.mxu0
        %v2040 = vadd.f32 %v1783, %v2039
        %2041 = vmatprep.mubr.f32.mxu0 %v378
        %2042 = vmatmul.mubr.f32.gmra.mxu0 %v377
        %v2043 = vpop.f32.mrf.mxu0
        %v2044 = vadd.f32 %v1787, %v2043
        %v2045 = vpop.f32.mrf.mxu0
        %v2046 = vadd.f32 %v1789, %v2045
        %2047 = vmatprep.mubr.f32.mxu0 %v388
        %2048 = vmatmul.mubr.f32.gmra.mxu0 %v387
        %v2049 = vpop.f32.mrf.mxu0
        %v2050 = vadd.f32 %v1793, %v2049
        %v2051 = vpop.f32.mrf.mxu0
        %v2052 = vadd.f32 %v1795, %v2051
        %2053 = vmatprep.mubr.f32.mxu0 %v398
        %2054 = vmatmul.mubr.f32.gmra.mxu0 %v397
        %v2055 = vpop.f32.mrf.mxu0
        %v2056 = vadd.f32 %v1799, %v2055
        %v2057 = vpop.f32.mrf.mxu0
        %v2058 = vadd.f32 %v1801, %v2057
        %2059 = vmatprep.mubr.f32.mxu0 %v408
        %2060 = vmatmul.mubr.f32.gmra.mxu0 %v407
        %v2061 = vpop.f32.mrf.mxu0
        %v2062 = vadd.f32 %v1805, %v2061
        %v2063 = vpop.f32.mrf.mxu0
        %v2064 = vadd.f32 %v1807, %v2063
        %2065 = vmatprep.mubr.f32.mxu0 %v418
        %2066 = vmatmul.mubr.f32.gmra.mxu0 %v417
        %v2067 = vpop.f32.mrf.mxu0
        %v2068 = vadd.f32 %v1811, %v2067
        %v2069 = vpop.f32.mrf.mxu0
        %v2070 = vadd.f32 %v1813, %v2069
        %2071 = vmatprep.mubr.f32.mxu0 %v428
        %2072 = vmatmul.mubr.f32.gmra.mxu0 %v427
        %v2073 = vpop.f32.mrf.mxu0
        %v2074 = vadd.f32 %v1817, %v2073
        %v2075 = vpop.f32.mrf.mxu0
        %v2076 = vadd.f32 %v1819, %v2075
        %2077 = vmatprep.mubr.f32.mxu0 %v438
        %2078 = vmatmul.mubr.f32.gmra.mxu0 %v437
        %v2079 = vpop.f32.mrf.mxu0
        %v2080 = vadd.f32 %v1823, %v2079
        %v2081 = vpop.f32.mrf.mxu0
        %v2082 = vadd.f32 %v1825, %v2081
        %2083 = vmatprep.mubr.f32.mxu0 %v448
        %2084 = vmatmul.mubr.f32.gmra.mxu0 %v447
        %v2085 = vpop.f32.mrf.mxu0
        %v2086 = vadd.f32 %v1829, %v2085
        %v2087 = vpop.f32.mrf.mxu0
        %v2088 = vadd.f32 %v1831, %v2087
        %2089 = vmatprep.mubr.f32.mxu0 %v458
        %2090 = vmatmul.mubr.f32.gmra.mxu0 %v457
        %v2091 = vpop.f32.mrf.mxu0
        %v2092 = vadd.f32 %v1835, %v2091
        %v2093 = vpop.f32.mrf.mxu0
        %v2094 = vadd.f32 %v1837, %v2093
        %2095 = vmatprep.mubr.f32.mxu0 %v468
        %2096 = vmatmul.mubr.f32.gmra.mxu0 %v467
        %v2097 = vpop.f32.mrf.mxu0
        %v2098 = vadd.f32 %v1841, %v2097
        %v2099 = vpop.f32.mrf.mxu0
        %v2100 = vadd.f32 %v1843, %v2099
        %2101 = vmatprep.mubr.f32.mxu0 %v478
        %2102 = vmatmul.mubr.f32.gmra.mxu0 %v477
        %v2103 = vpop.f32.mrf.mxu0
        %v2104 = vadd.f32 %v1847, %v2103
        %v2105 = vpop.f32.mrf.mxu0
        %v2106 = vadd.f32 %v1849, %v2105
        %2107 = vmatprep.mubr.f32.mxu0 %v488
        %2108 = vmatmul.mubr.f32.gmra.mxu0 %v487
        %v2109 = vpop.f32.mrf.mxu0
        %v2110 = vadd.f32 %v1853, %v2109
        %v2111 = vpop.f32.mrf.mxu0
        %v2112 = vadd.f32 %v1855, %v2111
        %2113 = vmatprep.mubr.f32.mxu0 %v498
        %2114 = vmatmul.mubr.f32.gmra.mxu0 %v497
        %v2115 = vpop.f32.mrf.mxu0
        %v2116 = vadd.f32 %v1859, %v2115
        %v2117 = vpop.f32.mrf.mxu0
        %v2118 = vadd.f32 %v1861, %v2117
        %2119 = vmatprep.mubr.f32.mxu0 %v508
        %2120 = vmatmul.mubr.f32.gmra.mxu0 %v507
        %v2121 = vpop.f32.mrf.mxu0
        %v2122 = vadd.f32 %v1865, %v2121
        %v2123 = vpop.f32.mrf.mxu0
        %v2124 = vadd.f32 %v1867, %v2123
        %2125 = vmatprep.mubr.f32.mxu0 %v518
        %2126 = vmatmul.mubr.f32.gmra.mxu0 %v517
        %v2127 = vpop.f32.mrf.mxu0
        %v2128 = vadd.f32 %v1871, %v2127
        %v2129 = vpop.f32.mrf.mxu0
        %v2130 = vadd.f32 %v1873, %v2129
        %2131 = vmatprep.mubr.f32.mxu0 %v528
        %2132 = vmatmul.mubr.f32.gmra.mxu0 %v527
        %v2133 = vpop.f32.mrf.mxu0
        %v2134 = vadd.f32 %v1877, %v2133
        %v2135 = vpop.f32.mrf.mxu0
        %v2136 = vadd.f32 %v1879, %v2135
        %2137 = vmatprep.mubr.f32.mxu0 %v538
        %2138 = vmatmul.mubr.f32.gmra.mxu0 %v537
        %v2139 = vpop.f32.mrf.mxu0
        %v2140 = vadd.f32 %v1883, %v2139
        %v2141 = vpop.f32.mrf.mxu0
        %v2142 = vadd.f32 %v1885, %v2141
        %2143 = vdwg.mxu0
        %v2144 = vld [vmem:[#allocation7] ss:$2 sm:$0x3]
        %v2146 = vlaneseq
        %v2147 = vshrl.u32 %v2146, 7
        %v2148 = vsub.s32 0, %v2147
        %v2149 = vrot.slane %v2144, %v2148
        %v2150 = vlaneseq
        %v2151 = vshrl.u32 %v2150, 7
        %v2152 = vsub.s32 1, %v2151
        %v2153 = vrot.slane %v2144, %v2152
        %v2156 = vmul.f32 %v1954, %v2149
        %v2157 = vmul.f32 %v1956, %v2153
        %v2158 = vmul.f32 %v1960, %v2149
        %v2159 = vmul.f32 %v1962, %v2153
        %v2160 = vmul.f32 %v1966, %v2149
        %v2161 = vmul.f32 %v1968, %v2153
        %v2162 = vmul.f32 %v1972, %v2149
        %v2163 = vmul.f32 %v1974, %v2153
        %v2164 = vmul.f32 %v1978, %v2149
        %v2165 = vmul.f32 %v1980, %v2153
        %v2166 = vmul.f32 %v1984, %v2149
        %v2167 = vmul.f32 %v1986, %v2153
        %v2168 = vmul.f32 %v1990, %v2149
        %v2169 = vmul.f32 %v1992, %v2153
        %v2170 = vmul.f32 %v1996, %v2149
        %v2171 = vmul.f32 %v1998, %v2153
        %v2172 = vmul.f32 %v2002, %v2149
        %v2173 = vmul.f32 %v2004, %v2153
        %v2174 = vmul.f32 %v2008, %v2149
        %v2175 = vmul.f32 %v2010, %v2153
        %v2176 = vmul.f32 %v2014, %v2149
        %v2177 = vmul.f32 %v2016, %v2153
        %v2178 = vmul.f32 %v2020, %v2149
        %v2179 = vmul.f32 %v2022, %v2153
        %v2180 = vmul.f32 %v2026, %v2149
        %v2181 = vmul.f32 %v2028, %v2153
        %v2182 = vmul.f32 %v2032, %v2149
        %v2183 = vmul.f32 %v2034, %v2153
        %v2184 = vmul.f32 %v2038, %v2149
        %v2185 = vmul.f32 %v2040, %v2153
        %v2186 = vmul.f32 %v2044, %v2149
        %v2187 = vmul.f32 %v2046, %v2153
        %v2188 = vmul.f32 %v2050, %v2149
        %v2189 = vmul.f32 %v2052, %v2153
        %v2190 = vmul.f32 %v2056, %v2149
        %v2191 = vmul.f32 %v2058, %v2153
        %v2192 = vmul.f32 %v2062, %v2149
        %v2193 = vmul.f32 %v2064, %v2153
        %v2194 = vmul.f32 %v2068, %v2149
        %v2195 = vmul.f32 %v2070, %v2153
        %v2196 = vmul.f32 %v2074, %v2149
        %v2197 = vmul.f32 %v2076, %v2153
        %v2198 = vmul.f32 %v2080, %v2149
        %v2199 = vmul.f32 %v2082, %v2153
        %v2200 = vmul.f32 %v2086, %v2149
        %v2201 = vmul.f32 %v2088, %v2153
        %v2202 = vmul.f32 %v2092, %v2149
        %v2203 = vmul.f32 %v2094, %v2153
        %v2204 = vmul.f32 %v2098, %v2149
        %v2205 = vmul.f32 %v2100, %v2153
        %v2206 = vmul.f32 %v2104, %v2149
        %v2207 = vmul.f32 %v2106, %v2153
        %v2208 = vmul.f32 %v2110, %v2149
        %v2209 = vmul.f32 %v2112, %v2153
        %v2210 = vmul.f32 %v2116, %v2149
        %v2211 = vmul.f32 %v2118, %v2153
        %v2212 = vmul.f32 %v2122, %v2149
        %v2213 = vmul.f32 %v2124, %v2153
        %v2214 = vmul.f32 %v2128, %v2149
        %v2215 = vmul.f32 %v2130, %v2153
        %v2216 = vmul.f32 %v2134, %v2149
        %v2217 = vmul.f32 %v2136, %v2153
        %v2218 = vmul.f32 %v2140, %v2149
        %v2219 = vmul.f32 %v2142, %v2153
        %s2220 = scalar_lea.vmem [#allocation7], 1
        %v2221 = vld [vmem:[%s2220] ss:$2 sm:$0x3]
        %v2223 = vlaneseq
        %v2224 = vshrl.u32 %v2223, 7
        %v2225 = vsub.s32 0, %v2224
        %v2226 = vrot.slane %v2221, %v2225
        %v2227 = vlaneseq
        %v2228 = vshrl.u32 %v2227, 7
        %v2229 = vsub.s32 1, %v2228
        %v2230 = vrot.slane %v2221, %v2229
        %v2233 = vadd.f32 %v2156, %v2226
        %v2234 = vadd.f32 %v2157, %v2230
        %v2235 = vadd.f32 %v2158, %v2226
        %v2236 = vadd.f32 %v2159, %v2230
        %v2237 = vadd.f32 %v2160, %v2226
        %v2238 = vadd.f32 %v2161, %v2230
        %v2239 = vadd.f32 %v2162, %v2226
        %v2240 = vadd.f32 %v2163, %v2230
        %v2241 = vadd.f32 %v2164, %v2226
        %v2242 = vadd.f32 %v2165, %v2230
        %v2243 = vadd.f32 %v2166, %v2226
        %v2244 = vadd.f32 %v2167, %v2230
        %v2245 = vadd.f32 %v2168, %v2226
        %v2246 = vadd.f32 %v2169, %v2230
        %v2247 = vadd.f32 %v2170, %v2226
        %v2248 = vadd.f32 %v2171, %v2230
        %v2249 = vadd.f32 %v2172, %v2226
        %v2250 = vadd.f32 %v2173, %v2230
        %v2251 = vadd.f32 %v2174, %v2226
        %v2252 = vadd.f32 %v2175, %v2230
        %v2253 = vadd.f32 %v2176, %v2226
        %v2254 = vadd.f32 %v2177, %v2230
        %v2255 = vadd.f32 %v2178, %v2226
        %v2256 = vadd.f32 %v2179, %v2230
        %v2257 = vadd.f32 %v2180, %v2226
        %v2258 = vadd.f32 %v2181, %v2230
        %v2259 = vadd.f32 %v2182, %v2226
        %v2260 = vadd.f32 %v2183, %v2230
        %v2261 = vadd.f32 %v2184, %v2226
        %v2262 = vadd.f32 %v2185, %v2230
        %v2263 = vadd.f32 %v2186, %v2226
        %v2264 = vadd.f32 %v2187, %v2230
        %v2265 = vadd.f32 %v2188, %v2226
        %v2266 = vadd.f32 %v2189, %v2230
        %v2267 = vadd.f32 %v2190, %v2226
        %v2268 = vadd.f32 %v2191, %v2230
        %v2269 = vadd.f32 %v2192, %v2226
        %v2270 = vadd.f32 %v2193, %v2230
        %v2271 = vadd.f32 %v2194, %v2226
        %v2272 = vadd.f32 %v2195, %v2230
        %v2273 = vadd.f32 %v2196, %v2226
        %v2274 = vadd.f32 %v2197, %v2230
        %v2275 = vadd.f32 %v2198, %v2226
        %v2276 = vadd.f32 %v2199, %v2230
        %v2277 = vadd.f32 %v2200, %v2226
        %v2278 = vadd.f32 %v2201, %v2230
        %v2279 = vadd.f32 %v2202, %v2226
        %v2280 = vadd.f32 %v2203, %v2230
        %v2281 = vadd.f32 %v2204, %v2226
        %v2282 = vadd.f32 %v2205, %v2230
        %v2283 = vadd.f32 %v2206, %v2226
        %v2284 = vadd.f32 %v2207, %v2230
        %v2285 = vadd.f32 %v2208, %v2226
        %v2286 = vadd.f32 %v2209, %v2230
        %v2287 = vadd.f32 %v2210, %v2226
        %v2288 = vadd.f32 %v2211, %v2230
        %v2289 = vadd.f32 %v2212, %v2226
        %v2290 = vadd.f32 %v2213, %v2230
        %v2291 = vadd.f32 %v2214, %v2226
        %v2292 = vadd.f32 %v2215, %v2230
        %v2293 = vadd.f32 %v2216, %v2226
        %v2294 = vadd.f32 %v2217, %v2230
        %v2295 = vadd.f32 %v2218, %v2226
        %v2296 = vadd.f32 %v2219, %v2230
        %2297 = vst [vmem:[%s216] sm:$0xff] %v2233
        %2298 = vst [vmem:[%s216 + $0x8] sm:$0xff] %v2234
        %2299 = vst [vmem:[%s216 + $0x10] sm:$0xff] %v2235
        %2300 = vst [vmem:[%s216 + $0x18] sm:$0xff] %v2236
        %2301 = vst [vmem:[%s216 + $0x20] sm:$0xff] %v2237
        %2302 = vst [vmem:[%s216 + $0x28] sm:$0xff] %v2238
        %2303 = vst [vmem:[%s216 + $0x30] sm:$0xff] %v2239
        %2304 = vst [vmem:[%s216 + $0x38] sm:$0xff] %v2240
        %2305 = vst [vmem:[%s216 + $0x40] sm:$0xff] %v2241
        %2306 = vst [vmem:[%s216 + $0x48] sm:$0xff] %v2242
        %2307 = vst [vmem:[%s216 + $0x50] sm:$0xff] %v2243
        %2308 = vst [vmem:[%s216 + $0x58] sm:$0xff] %v2244
        %2309 = vst [vmem:[%s216 + $0x60] sm:$0xff] %v2245
        %2310 = vst [vmem:[%s216 + $0x68] sm:$0xff] %v2246
        %2311 = vst [vmem:[%s216 + $0x70] sm:$0xff] %v2247
        %2312 = vst [vmem:[%s216 + $0x78] sm:$0xff] %v2248
        %2313 = vst [vmem:[%s216 + $0x80] sm:$0xff] %v2249
        %2314 = vst [vmem:[%s216 + $0x88] sm:$0xff] %v2250
        %2315 = vst [vmem:[%s216 + $0x90] sm:$0xff] %v2251
        %2316 = vst [vmem:[%s216 + $0x98] sm:$0xff] %v2252
        %2317 = vst [vmem:[%s216 + $0xa0] sm:$0xff] %v2253
        %2318 = vst [vmem:[%s216 + $0xa8] sm:$0xff] %v2254
        %2319 = vst [vmem:[%s216 + $0xb0] sm:$0xff] %v2255
        %2320 = vst [vmem:[%s216 + $0xb8] sm:$0xff] %v2256
        %2321 = vst [vmem:[%s216 + $0xc0] sm:$0xff] %v2257
        %2322 = vst [vmem:[%s216 + $0xc8] sm:$0xff] %v2258
        %2323 = vst [vmem:[%s216 + $0xd0] sm:$0xff] %v2259
        %2324 = vst [vmem:[%s216 + $0xd8] sm:$0xff] %v2260
        %2325 = vst [vmem:[%s216 + $0xe0] sm:$0xff] %v2261
        %2326 = vst [vmem:[%s216 + $0xe8] sm:$0xff] %v2262
        %2327 = vst [vmem:[%s216 + $0xf0] sm:$0xff] %v2263
        %2328 = vst [vmem:[%s216 + $0xf8] sm:$0xff] %v2264
        %2329 = vst [vmem:[%s216 + $0x100] sm:$0xff] %v2265
        %2330 = vst [vmem:[%s216 + $0x108] sm:$0xff] %v2266
        %2331 = vst [vmem:[%s216 + $0x110] sm:$0xff] %v2267
        %2332 = vst [vmem:[%s216 + $0x118] sm:$0xff] %v2268
        %2333 = vst [vmem:[%s216 + $0x120] sm:$0xff] %v2269
        %2334 = vst [vmem:[%s216 + $0x128] sm:$0xff] %v2270
        %2335 = vst [vmem:[%s216 + $0x130] sm:$0xff] %v2271
        %2336 = vst [vmem:[%s216 + $0x138] sm:$0xff] %v2272
        %2337 = vst [vmem:[%s216 + $0x140] sm:$0xff] %v2273
        %2338 = vst [vmem:[%s216 + $0x148] sm:$0xff] %v2274
        %2339 = vst [vmem:[%s216 + $0x150] sm:$0xff] %v2275
        %2340 = vst [vmem:[%s216 + $0x158] sm:$0xff] %v2276
        %2341 = vst [vmem:[%s216 + $0x160] sm:$0xff] %v2277
        %2342 = vst [vmem:[%s216 + $0x168] sm:$0xff] %v2278
        %2343 = vst [vmem:[%s216 + $0x170] sm:$0xff] %v2279
        %2344 = vst [vmem:[%s216 + $0x178] sm:$0xff] %v2280
        %2345 = vst [vmem:[%s216 + $0x180] sm:$0xff] %v2281
        %2346 = vst [vmem:[%s216 + $0x188] sm:$0xff] %v2282
        %2347 = vst [vmem:[%s216 + $0x190] sm:$0xff] %v2283
        %2348 = vst [vmem:[%s216 + $0x198] sm:$0xff] %v2284
        %2349 = vst [vmem:[%s216 + $0x1a0] sm:$0xff] %v2285
        %2350 = vst [vmem:[%s216 + $0x1a8] sm:$0xff] %v2286
        %2351 = vst [vmem:[%s216 + $0x1b0] sm:$0xff] %v2287
        %2352 = vst [vmem:[%s216 + $0x1b8] sm:$0xff] %v2288
        %2353 = vst [vmem:[%s216 + $0x1c0] sm:$0xff] %v2289
        %2354 = vst [vmem:[%s216 + $0x1c8] sm:$0xff] %v2290
        %2355 = vst [vmem:[%s216 + $0x1d0] sm:$0xff] %v2291
        %2356 = vst [vmem:[%s216 + $0x1d8] sm:$0xff] %v2292
        %2357 = vst [vmem:[%s216 + $0x1e0] sm:$0xff] %v2293
        %2358 = vst [vmem:[%s216 + $0x1e8] sm:$0xff] %v2294
        %2359 = vst [vmem:[%s216 + $0x1f0] sm:$0xff] %v2295
        %2360 = vst [vmem:[%s216 + $0x1f8] sm:$0xff] %v2296
        %s2361 = sand.u32 %s97, 1
        %s2362 = scalar_lea.sflag [#allocation4], %s2361
        %s2363 = sand.u32 %s97, 1
        %s2364 = smul.addr %s2363, 512
        %s2365 = scalar_lea.vmem [#allocation8], %s2364
        // Predicated region
        $region45: #{conv1x1_bn.1} parent=31 // pred_check
          %p2366 = pneg %p107
        $region46: #{conv1x1_bn.1} parent=31 // pred_check_branch
          %2368 = sbr.rel (%p2366) target = $region48
        $region47: #{conv1x1_bn.1} parent=31 // pred_region
          %s2369 = smul.u32 32, %s21
          %s2371 = ssub.s32 8192, 8192
          %2372 = vsyncadd %s2362, %s2371
          %s2373 = smul.addr %s2369, 2
          %s2374 = smul.addr %s2373, 128
          %s2375 = scalar_lea.hbm %s3, %s2374
          %s2376 = sshll.u32 %s2365, 4
          %s2377 = int_to_ptr.vmem [resolvable:$true] %s2376
          %2382 = dma.vmem_to_hbm [thread:$0]  %s2377, 8192, %s2375, %s2362, 256, 256, 16
        $region48: #{conv1x1_bn.1} parent=31 // pred_fallthru
          _
      $region32: #{conv1x1_bn.1} parent=5 // pred_fallthru
        _
      %p2383 = scmp.le.s32.totalorder 2, %s16
      // Predicated region
      $region49: #{conv1x1_bn.1} parent=5 // pred_check
        %p2384 = pneg %p2383
      $region50: #{conv1x1_bn.1} parent=5 // pred_check_branch
        %2386 = sbr.rel (%p2384) target = $region52
      $region51: #{conv1x1_bn.1} parent=5 // pred_region
        %s2387 = ssub.s32 %s16, 2
        // Predicated region
        $region53: #{conv1x1_bn.1} parent=51 // pred_check
          %p2388 = pneg %p113
        $region54: #{conv1x1_bn.1} parent=51 // pred_check_branch
          %2390 = sbr.rel (%p2388) target = $region56
        $region55: #{conv1x1_bn.1} parent=51 // pred_region
          %s2391 = sand.u32 %s98, 1
          %s2392 = scalar_lea.sflag [#allocation4], %s2391
          %s2393 = sand.u32 %s98, 1
          %s2394 = smul.addr %s2393, 512
          %s2395 = scalar_lea.vmem [#allocation8], %s2394
          %2396 = dma.done %s2392, 8192
        $region56: #{conv1x1_bn.1} parent=51 // pred_fallthru
          _
      $region52: #{conv1x1_bn.1} parent=5 // pred_fallthru
        _
    $region6: #{conv1x1_bn.1} parent=1 // loop_footer
      %s20 = sadd.s32 1, %s16
    $region7: #{conv1x1_bn.1} parent=1 // loop_footer_branch
      %15 = sbr.rel target = $region3
    $region8: #{conv1x1_bn.1} parent=1 // loop_exit
      _
    %2397 = vsyncpa [#allocation3], 1
    %s2398 = scalar_lea.sflag [#allocation3], 1
    %2399 = vsyncpa %s2398, 1
    %2400 = vsyncpa [#allocation6], 1
    %2401 = vsyncpa [#allocation4], 1
    %s2402 = scalar_lea.sflag [#allocation4], 1
    %2403 = vsyncpa %s2402, 1

</llo_original>
